<compile_context>
chip_gen: v5e
topology: v5e:2x2
jax: 0.10.0
libtpu: 0.0.40
codegen_flags: <defaults>
</compile_context>

<pallas_src>
import functools
import math

import jax
import jax.numpy as jnp
from jax.experimental import pallas as pl
from jax.experimental.pallas import tpu as pltpu


def _fusion_kernel(Bb, S, D, H,
                   ft_ref,      # (2, N, D) f32  : [geo_feat ; topo_feat]
                   gv_ref,      # (N, 8)    f32  : geo vectors, lane-padded 3->8
                   wA_ref,      # (7D+8, D) bf16 : packed (., D) weights
                   wqkv_ref,    # (D, 3D)   bf16 : fused Q|K|V weight
                   bias_ref,    # (72, D)   f32  : 9 bias rows at stride 8
                   out_ref):    # (N, D)    f32
    f32 = jnp.float32
    bf16 = jnp.bfloat16
    N = Bb * S
    hd = D // H
    G = 2 * Bb * H                       # (direction, batch, head) groups
    scale = 1.0 / math.sqrt(hd)

    # Static row offsets inside the packed weight slab (all multiples of 8).
    O_GW1F = 0
    O_GW1V = D            # geo-vector rows, zero-padded 3 -> 8
    O_GW2 = D + 8
    O_TW1 = 2 * D + 8
    O_TW2 = 3 * D + 8
    O_WO = 4 * D + 8
    O_WGG = 5 * D + 8     # gate weight rows acting on fused_geo
    O_WGT = 6 * D + 8     # gate weight rows acting on fused_topo

    def mm(x, w):
        # bf16 MXU operands, f32 accumulation.
        return jnp.dot(x.astype(bf16), w, preferred_element_type=f32)

    wA = wA_ref[...]                      # tiny (~15 KiB), load once
    bias = bias_ref[...]

    def brow(i):                          # (1, D) bias row, 8-aligned slice
        return bias[8 * i:8 * i + 1]

    b_gb1, b_gb2, b_tb1, b_tb2 = brow(0), brow(1), brow(2), brow(3)
    b_q, b_k, b_v, b_o, b_g = brow(4), brow(5), brow(6), brow(7), brow(8)

    gf = ft_ref[0]        # (N, D) geometric features
    tp = ft_ref[1]        # (N, D) topological features
    gv = gv_ref[...]      # (N, 8) geometric vectors (padded)

    # ---- geo / topo MLP encoders (Linear -> ReLU -> Linear) ----
    # geo input concat is replaced by a split first-layer weight:
    #   relu(feat @ W_a + vec @ W_b + b1)
    h = jnp.maximum(mm(gf, wA[O_GW1F:O_GW1F + D])
                    + mm(gv, wA[O_GW1V:O_GW1V + 8]) + b_gb1, 0.0)
    geo_enc = mm(h, wA[O_GW2:O_GW2 + D]) + b_gb2

    h = jnp.maximum(mm(tp, wA[O_TW1:O_TW1 + D]) + b_tb1, 0.0)
    topo_enc = mm(h, wA[O_TW2:O_TW2 + D]) + b_tb2

    # ---- one fused Q|K|V projection for both encoder outputs ----
    enc_all = jnp.concatenate([geo_enc, topo_enc], axis=0)   # (2N, D) [geo;topo]
    qkv = mm(enc_all, wqkv_ref[...])                          # (2N, 3D)

    q_all = qkv[:, :D] + b_q                                  # queries: [geo;topo]
    k_src = qkv[:, D:2 * D] + b_k
    v_src = qkv[:, 2 * D:] + b_v
    # Direction swap (sublane-aligned row swap): direction 1 = geo queries vs
    # topo keys/values, direction 2 = topo queries vs geo keys/values.
    k_all = jnp.concatenate([k_src[N:], k_src[:N]], axis=0)   # [topo;geo]
    v_all = jnp.concatenate([v_src[N:], v_src[:N]], axis=0)

    # ---- head split -> batched layout (G, S, hd); no mask needed ----
    def to_heads(x):   # (2N, D) -> (G, S, hd), group order = (head, dir, batch)
        xs = jnp.concatenate([x[:, i * hd:(i + 1) * hd] for i in range(H)],
                             axis=0)                          # (H*2N, hd)
        return xs.reshape(G, S, hd)                           # free reshape

    q3 = to_heads(q_all) * scale
    k3 = to_heads(k_all)
    v3 = to_heads(v_all)

    # Batched scores: (G, S, S) — O(G*S^2) instead of O((G*S)^2).
    s = jax.lax.dot_general(q3.astype(bf16), k3.astype(bf16),
                            (((2,), (2,)), ((0,), (0,))),
                            preferred_element_type=f32)
    s = s - jnp.max(s, axis=-1, keepdims=True)
    p = jnp.exp(s)
    p = p * pl.reciprocal(jnp.sum(p, axis=-1, keepdims=True), approx=True)

    o3 = jax.lax.dot_general(p.astype(bf16), v3.astype(bf16),
                             (((2,), (1,)), ((0,), (0,))),
                             preferred_element_type=f32)      # (G, S, hd)

    # Merge heads back: (G, S, hd) -> (H*2N, hd) -> (2N, D), then one output
    # projection for both directions at once.
    o2 = o3.reshape(2 * N * H, hd)
    o = jnp.concatenate([o2[i * 2 * N:(i + 1) * 2 * N] for i in range(H)],
                        axis=1)                               # (2N, D)
    fused = mm(o, wA[O_WO:O_WO + D]) + b_o                    # (2N, D)
    fused_geo = fused[:N]
    fused_topo = fused[N:]

    # ---- sigmoid gate: two matmuls against the split gate weight, no concat ----
    gate = jax.nn.sigmoid(mm(fused_geo, wA[O_WGG:O_WGG + D])
                          + mm(fused_topo, wA[O_WGT:O_WGT + D]) + b_g)
    out_ref[...] = gate * fused_geo + (1.0 - gate) * fused_topo


def geometric_topological_fusion(geo_feat, geo_vec, topo_feat, params,
                                 num_heads, batch_block=None):
    B, S, D = geo_feat.shape
    H = num_heads
    assert D % H == 0 and D % 8 == 0
    if batch_block is None:
        # Single grid step by default (best on single-TC v5e/v6e); pass
        # batch_block=B//2 on v7x so the "parallel" grid spans both TCs.
        batch_block = B
    assert B % batch_block == 0
    num_blocks = B // batch_block
    N = batch_block * S
    assert N % 8 == 0, "batch_block * seq_len must be a multiple of 8 sublanes"

    f32, bf16 = jnp.float32, jnp.bfloat16

    # ---- pack parameters into 3 slabs (fewer DMA descriptors) ----
    gw1 = params["gw1"]                                    # (D+3, D)
    gw1v_pad = jnp.zeros((8, D), f32).at[:3].set(gw1[D:])  # pad 3 -> 8 rows
    wA = jnp.concatenate(
        [gw1[:D], gw1v_pad, params["gw2"], params["tw1"], params["tw2"],
         params["wo"], params["gwg"], params["gwt"]], axis=0).astype(bf16)
    wqkv = jnp.concatenate([params["wq"], params["wk"], params["wv"]],
                           axis=1).astype(bf16)            # (D, 3D)
    bias_rows = jnp.concatenate(
        [params["gb1"], params["gb2"], params["tb1"], params["tb2"],
         params["bq"], params["bk"], params["bv"], params["bo"],
         params["gb"]], axis=0)                            # (9, D)
    bias = jnp.zeros((9 * 8, D), f32).at[0::8, :].set(bias_rows)  # 8-row stride

    # ---- data: stack geo/topo features; lane-pad vectors 3 -> 8 ----
    feats = jnp.stack([geo_feat.reshape(B * S, D),
                       topo_feat.reshape(B * S, D)], axis=0)      # (2, B*S, D)
    gv2 = jnp.zeros((B * S, 8), f32).at[:, :3].set(geo_vec.reshape(B * S, 3))

    kernel = functools.partial(_fusion_kernel, batch_block, S, D, H)

    out2 = pl.pallas_call(
        kernel,
        out_shape=jax.ShapeDtypeStruct((B * S, D), f32),
        grid_spec=pltpu.PrefetchScalarGridSpec(
            num_scalar_prefetch=0,
            grid=(num_blocks,),
            in_specs=[
                pl.BlockSpec((2, N, D), lambda i: (0, i, 0)),   # features
                pl.BlockSpec((N, 8), lambda i: (i, 0)),         # vectors
                pl.BlockSpec(wA.shape, lambda i: (0, 0)),       # packed weights
                pl.BlockSpec(wqkv.shape, lambda i: (0, 0)),     # fused QKV
                pl.BlockSpec(bias.shape, lambda i: (0, 0)),     # packed biases
            ],
            out_specs=pl.BlockSpec((N, D), lambda i: (i, 0)),
        ),
        compiler_params=pltpu.CompilerParams(
            dimension_semantics=("parallel",)),
    )(feats, gv2, wA, wqkv, bias)
    return out2.reshape(B, S, D)


def init_params(key, D):
    ks = jax.random.split(key, 19)

    def W(k, shape, scale=0.1):
        return jax.random.normal(k, shape, jnp.float32) * scale

    p = {}
    p["gw1"] = W(ks[0], (D + 3, D)); p["gb1"] = W(ks[1], (1, D))
    p["gw2"] = W(ks[2], (D, D));     p["gb2"] = W(ks[3], (1, D))
    p["tw1"] = W(ks[4], (D, D));     p["tb1"] = W(ks[5], (1, D))
    p["tw2"] = W(ks[6], (D, D));     p["tb2"] = W(ks[7], (1, D))
    p["wq"] = W(ks[8], (D, D));  p["bq"] = W(ks[9], (1, D))
    p["wk"] = W(ks[10], (D, D)); p["bk"] = W(ks[11], (1, D))
    p["wv"] = W(ks[12], (D, D)); p["bv"] = W(ks[13], (1, D))
    p["wo"] = W(ks[14], (D, D)); p["bo"] = W(ks[15], (1, D))
    p["gwg"] = W(ks[16], (D, D))   # gate weight rows for fused_geo half
    p["gwt"] = W(ks[17], (D, D))   # gate weight rows for fused_topo half
    p["gb"] = W(ks[18], (1, D))
    return p


def reference(geo_feat, geo_vec, topo_feat, p, H):
    """Pure-JAX f32 reference for correctness checking."""
    B, S, D = geo_feat.shape
    hd = D // H
    geo_in = jnp.concatenate([geo_feat, geo_vec], -1)
    geo_enc = jnp.maximum(geo_in @ p["gw1"] + p["gb1"], 0) @ p["gw2"] + p["gb2"]
    topo_enc = jnp.maximum(topo_feat @ p["tw1"] + p["tb1"], 0) @ p["tw2"] + p["tb2"]

    def mha(qs, kvs):
        q = qs @ p["wq"] + p["bq"]
        k = kvs @ p["wk"] + p["bk"]
        v = kvs @ p["wv"] + p["bv"]
        Sq, Skv = q.shape[1], k.shape[1]
        q = q.reshape(B, Sq, H, hd).transpose(0, 2, 1, 3)
        k = k.reshape(B, Skv, H, hd).transpose(0, 2, 1, 3)
        v = v.reshape(B, Skv, H, hd).transpose(0, 2, 1, 3)
        s = jnp.einsum('bhqd,bhkd->bhqk', q, k) / math.sqrt(hd)
        a = jax.nn.softmax(s, axis=-1)
        o = jnp.einsum('bhqk,bhkd->bhqd', a, v).transpose(0, 2, 1, 3).reshape(B, Sq, D)
        return o @ p["wo"] + p["bo"]

    fg = mha(geo_enc, topo_enc)
    ft = mha(topo_enc, geo_enc)
    gate = jax.nn.sigmoid(fg @ p["gwg"] + ft @ p["gwt"] + p["gb"])
    return gate * fg + (1 - gate) * ft


if __name__ == "__main__":
    B, S, D, H = 2, 8, 32, 8
    key = jax.random.PRNGKey(0)
    k1, k2, k3, kp = jax.random.split(key, 4)
    geometric_features = jax.random.normal(k1, (B, S, D), jnp.float32)
    geometric_vectors = jax.random.normal(k2, (B, S, 3), jnp.float32)
    topological_features = jax.random.normal(k3, (B, S, D), jnp.float32)
    params = init_params(kp, D)

    out = geometric_topological_fusion(
        geometric_features, geometric_vectors, topological_features, params, H)
    out = jax.block_until_ready(out)

    ref = reference(geometric_features, geometric_vectors, topological_features,
                    params, H)
    max_err = float(jnp.max(jnp.abs(out - ref)))
    # bf16 MXU operands + approx reciprocal -> tolerance loosened vs pure f32.
    assert out.shape == (B, S, D) and max_err < 5e-2, f"max_err={max_err}"
    print("KERNEL_OK")
</pallas_src>

<mosaic_0001>
module attributes {stable_mosaic.version = 11 : i64} {
  func.func @_fusion_kernel(%arg0: i32, %arg1: memref<2x16x32xf32, #tpu.memory_space<vmem>>, %arg2: memref<16x8xf32, #tpu.memory_space<vmem>>, %arg3: memref<232x32xbf16, #tpu.memory_space<vmem>>, %arg4: memref<32x96xbf16, #tpu.memory_space<vmem>>, %arg5: memref<72x32xf32, #tpu.memory_space<vmem>>, %arg6: memref<16x32xf32, #tpu.memory_space<vmem>>) attributes {dimension_semantics = [#tpu.dimension_semantics<parallel>], iteration_bounds = array<i64: 1>, scalar_prefetch = 0 : i64, scratch_operands = 0 : i64, tpu.core_type = #tpu.core_type<tc>, window_params = [{transform_indices = @transform_0, window_bounds = array<i64: 2, 16, 32>}, {transform_indices = @transform_1, window_bounds = array<i64: 16, 8>}, {pipeline_mode = #tpu.pipeline_mode<synchronous>, transform_indices = @transform_2, window_bounds = array<i64: 232, 32>}, {pipeline_mode = #tpu.pipeline_mode<synchronous>, transform_indices = @transform_3, window_bounds = array<i64: 32, 96>}, {pipeline_mode = #tpu.pipeline_mode<synchronous>, transform_indices = @transform_4, window_bounds = array<i64: 72, 32>}, {transform_indices = @transform_5, window_bounds = array<i64: 16, 32>}]} {
    %c0 = arith.constant 0 : index
    %c0_0 = arith.constant 0 : index
    %0 = vector.load %arg3[%c0, %c0_0] : memref<232x32xbf16, #tpu.memory_space<vmem>>, vector<232x32xbf16>
    %c0_1 = arith.constant 0 : index
    %c0_2 = arith.constant 0 : index
    %1 = vector.load %arg5[%c0_1, %c0_2] : memref<72x32xf32, #tpu.memory_space<vmem>>, vector<72x32xf32>
    %2 = vector.extract_strided_slice %1 {offsets = [0, 0], sizes = [1, 32], strides = [1, 1]} : vector<72x32xf32> to vector<1x32xf32>
    %3 = vector.extract_strided_slice %1 {offsets = [8, 0], sizes = [1, 32], strides = [1, 1]} : vector<72x32xf32> to vector<1x32xf32>
    %4 = vector.extract_strided_slice %1 {offsets = [16, 0], sizes = [1, 32], strides = [1, 1]} : vector<72x32xf32> to vector<1x32xf32>
    %5 = vector.extract_strided_slice %1 {offsets = [24, 0], sizes = [1, 32], strides = [1, 1]} : vector<72x32xf32> to vector<1x32xf32>
    %6 = vector.extract_strided_slice %1 {offsets = [32, 0], sizes = [1, 32], strides = [1, 1]} : vector<72x32xf32> to vector<1x32xf32>
    %7 = vector.extract_strided_slice %1 {offsets = [40, 0], sizes = [1, 32], strides = [1, 1]} : vector<72x32xf32> to vector<1x32xf32>
    %8 = vector.extract_strided_slice %1 {offsets = [48, 0], sizes = [1, 32], strides = [1, 1]} : vector<72x32xf32> to vector<1x32xf32>
    %9 = vector.extract_strided_slice %1 {offsets = [56, 0], sizes = [1, 32], strides = [1, 1]} : vector<72x32xf32> to vector<1x32xf32>
    %10 = vector.extract_strided_slice %1 {offsets = [64, 0], sizes = [1, 32], strides = [1, 1]} : vector<72x32xf32> to vector<1x32xf32>
    %c0_3 = arith.constant 0 : index
    %c0_4 = arith.constant 0 : index
    %c0_5 = arith.constant 0 : index
    %11 = vector.load %arg1[%c0_3, %c0_4, %c0_5] : memref<2x16x32xf32, #tpu.memory_space<vmem>>, vector<1x16x32xf32>
    %12 = vector.shape_cast %11 : vector<1x16x32xf32> to vector<16x32xf32>
    %c1 = arith.constant 1 : index
    %c0_6 = arith.constant 0 : index
    %c0_7 = arith.constant 0 : index
    %13 = vector.load %arg1[%c1, %c0_6, %c0_7] : memref<2x16x32xf32, #tpu.memory_space<vmem>>, vector<1x16x32xf32>
    %14 = vector.shape_cast %13 : vector<1x16x32xf32> to vector<16x32xf32>
    %c0_8 = arith.constant 0 : index
    %c0_9 = arith.constant 0 : index
    %15 = vector.load %arg2[%c0_8, %c0_9] : memref<16x8xf32, #tpu.memory_space<vmem>>, vector<16x8xf32>
    %16 = vector.extract_strided_slice %0 {offsets = [0, 0], sizes = [32, 32], strides = [1, 1]} : vector<232x32xbf16> to vector<32x32xbf16>
    %17 = arith.truncf %12 : vector<16x32xf32> to vector<16x32xbf16>
    %cst = arith.constant dense<0.000000e+00> : vector<16x32xf32>
    %18 = tpu.matmul %17, %16, %cst {dimension_numbers = #tpu.dot_dimension_numbers<[1], [0], [0], [1], [0, 0, 1, 1], [], []>} : vector<16x32xbf16>, vector<32x32xbf16>, vector<16x32xf32> -> vector<16x32xf32>
    %19 = vector.extract_strided_slice %0 {offsets = [32, 0], sizes = [8, 32], strides = [1, 1]} : vector<232x32xbf16> to vector<8x32xbf16>
    %20 = arith.truncf %15 : vector<16x8xf32> to vector<16x8xbf16>
    %cst_10 = arith.constant dense<0.000000e+00> : vector<16x32xf32>
    %21 = tpu.matmul %20, %19, %cst_10 {dimension_numbers = #tpu.dot_dimension_numbers<[1], [0], [0], [1], [0, 0, 1, 1], [], []>} : vector<16x8xbf16>, vector<8x32xbf16>, vector<16x32xf32> -> vector<16x32xf32>
    %22 = arith.addf %18, %21 : vector<16x32xf32>
    %23 = vector.broadcast %2 : vector<1x32xf32> to vector<16x32xf32>
    %24 = arith.addf %22, %23 : vector<16x32xf32>
    %cst_11 = arith.constant 0.000000e+00 : f32
    %25 = vector.broadcast %cst_11 : f32 to vector<16x32xf32>
    %26 = arith.maximumf %24, %25 : vector<16x32xf32>
    %27 = vector.extract_strided_slice %0 {offsets = [40, 0], sizes = [32, 32], strides = [1, 1]} : vector<232x32xbf16> to vector<32x32xbf16>
    %28 = arith.truncf %26 : vector<16x32xf32> to vector<16x32xbf16>
    %cst_12 = arith.constant dense<0.000000e+00> : vector<16x32xf32>
    %29 = tpu.matmul %28, %27, %cst_12 {dimension_numbers = #tpu.dot_dimension_numbers<[1], [0], [0], [1], [0, 0, 1, 1], [], []>} : vector<16x32xbf16>, vector<32x32xbf16>, vector<16x32xf32> -> vector<16x32xf32>
    %30 = vector.broadcast %3 : vector<1x32xf32> to vector<16x32xf32>
    %31 = arith.addf %29, %30 : vector<16x32xf32>
    %32 = vector.extract_strided_slice %0 {offsets = [72, 0], sizes = [32, 32], strides = [1, 1]} : vector<232x32xbf16> to vector<32x32xbf16>
    %33 = arith.truncf %14 : vector<16x32xf32> to vector<16x32xbf16>
    %cst_13 = arith.constant dense<0.000000e+00> : vector<16x32xf32>
    %34 = tpu.matmul %33, %32, %cst_13 {dimension_numbers = #tpu.dot_dimension_numbers<[1], [0], [0], [1], [0, 0, 1, 1], [], []>} : vector<16x32xbf16>, vector<32x32xbf16>, vector<16x32xf32> -> vector<16x32xf32>
    %35 = vector.broadcast %4 : vector<1x32xf32> to vector<16x32xf32>
    %36 = arith.addf %34, %35 : vector<16x32xf32>
    %cst_14 = arith.constant 0.000000e+00 : f32
    %37 = vector.broadcast %cst_14 : f32 to vector<16x32xf32>
    %38 = arith.maximumf %36, %37 : vector<16x32xf32>
    %39 = vector.extract_strided_slice %0 {offsets = [104, 0], sizes = [32, 32], strides = [1, 1]} : vector<232x32xbf16> to vector<32x32xbf16>
    %40 = arith.truncf %38 : vector<16x32xf32> to vector<16x32xbf16>
    %cst_15 = arith.constant dense<0.000000e+00> : vector<16x32xf32>
    %41 = tpu.matmul %40, %39, %cst_15 {dimension_numbers = #tpu.dot_dimension_numbers<[1], [0], [0], [1], [0, 0, 1, 1], [], []>} : vector<16x32xbf16>, vector<32x32xbf16>, vector<16x32xf32> -> vector<16x32xf32>
    %42 = vector.broadcast %5 : vector<1x32xf32> to vector<16x32xf32>
    %43 = arith.addf %41, %42 : vector<16x32xf32>
    %44 = tpu.concatenate %31, %43 in 0 : vector<16x32xf32>, vector<16x32xf32> -> vector<32x32xf32>
    %c0_16 = arith.constant 0 : index
    %c0_17 = arith.constant 0 : index
    %45 = vector.load %arg4[%c0_16, %c0_17] : memref<32x96xbf16, #tpu.memory_space<vmem>>, vector<32x96xbf16>
    %46 = arith.truncf %44 : vector<32x32xf32> to vector<32x32xbf16>
    %cst_18 = arith.constant dense<0.000000e+00> : vector<32x96xf32>
    %47 = tpu.matmul %46, %45, %cst_18 {dimension_numbers = #tpu.dot_dimension_numbers<[1], [0], [0], [1], [0, 0, 1, 1], [], []>} : vector<32x32xbf16>, vector<32x96xbf16>, vector<32x96xf32> -> vector<32x96xf32>
    %48 = vector.extract_strided_slice %47 {offsets = [0, 0], sizes = [32, 32], strides = [1, 1]} : vector<32x96xf32> to vector<32x32xf32>
    %49 = vector.broadcast %6 : vector<1x32xf32> to vector<32x32xf32>
    %50 = arith.addf %48, %49 : vector<32x32xf32>
    %51 = vector.extract_strided_slice %47 {offsets = [0, 32], sizes = [32, 32], strides = [1, 1]} : vector<32x96xf32> to vector<32x32xf32>
    %52 = vector.broadcast %7 : vector<1x32xf32> to vector<32x32xf32>
    %53 = arith.addf %51, %52 : vector<32x32xf32>
    %54 = vector.extract_strided_slice %47 {offsets = [0, 64], sizes = [32, 32], strides = [1, 1]} : vector<32x96xf32> to vector<32x32xf32>
    %55 = vector.broadcast %8 : vector<1x32xf32> to vector<32x32xf32>
    %56 = arith.addf %54, %55 : vector<32x32xf32>
    %57 = vector.extract_strided_slice %53 {offsets = [16, 0], sizes = [16, 32], strides = [1, 1]} : vector<32x32xf32> to vector<16x32xf32>
    %58 = vector.extract_strided_slice %53 {offsets = [0, 0], sizes = [16, 32], strides = [1, 1]} : vector<32x32xf32> to vector<16x32xf32>
    %59 = tpu.concatenate %57, %58 in 0 : vector<16x32xf32>, vector<16x32xf32> -> vector<32x32xf32>
    %60 = vector.extract_strided_slice %56 {offsets = [16, 0], sizes = [16, 32], strides = [1, 1]} : vector<32x32xf32> to vector<16x32xf32>
    %61 = vector.extract_strided_slice %56 {offsets = [0, 0], sizes = [16, 32], strides = [1, 1]} : vector<32x32xf32> to vector<16x32xf32>
    %62 = tpu.concatenate %60, %61 in 0 : vector<16x32xf32>, vector<16x32xf32> -> vector<32x32xf32>
    %63 = vector.extract_strided_slice %50 {offsets = [0, 0], sizes = [32, 4], strides = [1, 1]} : vector<32x32xf32> to vector<32x4xf32>
    %64 = vector.extract_strided_slice %50 {offsets = [0, 4], sizes = [32, 4], strides = [1, 1]} : vector<32x32xf32> to vector<32x4xf32>
    %65 = vector.extract_strided_slice %50 {offsets = [0, 8], sizes = [32, 4], strides = [1, 1]} : vector<32x32xf32> to vector<32x4xf32>
    %66 = vector.extract_strided_slice %50 {offsets = [0, 12], sizes = [32, 4], strides = [1, 1]} : vector<32x32xf32> to vector<32x4xf32>
    %67 = vector.extract_strided_slice %50 {offsets = [0, 16], sizes = [32, 4], strides = [1, 1]} : vector<32x32xf32> to vector<32x4xf32>
    %68 = vector.extract_strided_slice %50 {offsets = [0, 20], sizes = [32, 4], strides = [1, 1]} : vector<32x32xf32> to vector<32x4xf32>
    %69 = vector.extract_strided_slice %50 {offsets = [0, 24], sizes = [32, 4], strides = [1, 1]} : vector<32x32xf32> to vector<32x4xf32>
    %70 = vector.extract_strided_slice %50 {offsets = [0, 28], sizes = [32, 4], strides = [1, 1]} : vector<32x32xf32> to vector<32x4xf32>
    %71 = tpu.concatenate %63, %64, %65, %66, %67, %68, %69, %70 in 0 : vector<32x4xf32>, vector<32x4xf32>, vector<32x4xf32>, vector<32x4xf32>, vector<32x4xf32>, vector<32x4xf32>, vector<32x4xf32>, vector<32x4xf32> -> vector<256x4xf32>
    %72 = vector.shape_cast %71 : vector<256x4xf32> to vector<32x8x4xf32>
    %cst_19 = arith.constant 5.000000e-01 : f32
    %73 = vector.broadcast %cst_19 : f32 to vector<32x8x4xf32>
    %74 = arith.mulf %72, %73 : vector<32x8x4xf32>
    %75 = vector.extract_strided_slice %59 {offsets = [0, 0], sizes = [32, 4], strides = [1, 1]} : vector<32x32xf32> to vector<32x4xf32>
    %76 = vector.extract_strided_slice %59 {offsets = [0, 4], sizes = [32, 4], strides = [1, 1]} : vector<32x32xf32> to vector<32x4xf32>
    %77 = vector.extract_strided_slice %59 {offsets = [0, 8], sizes = [32, 4], strides = [1, 1]} : vector<32x32xf32> to vector<32x4xf32>
    %78 = vector.extract_strided_slice %59 {offsets = [0, 12], sizes = [32, 4], strides = [1, 1]} : vector<32x32xf32> to vector<32x4xf32>
    %79 = vector.extract_strided_slice %59 {offsets = [0, 16], sizes = [32, 4], strides = [1, 1]} : vector<32x32xf32> to vector<32x4xf32>
    %80 = vector.extract_strided_slice %59 {offsets = [0, 20], sizes = [32, 4], strides = [1, 1]} : vector<32x32xf32> to vector<32x4xf32>
    %81 = vector.extract_strided_slice %59 {offsets = [0, 24], sizes = [32, 4], strides = [1, 1]} : vector<32x32xf32> to vector<32x4xf32>
    %82 = vector.extract_strided_slice %59 {offsets = [0, 28], sizes = [32, 4], strides = [1, 1]} : vector<32x32xf32> to vector<32x4xf32>
    %83 = tpu.concatenate %75, %76, %77, %78, %79, %80, %81, %82 in 0 : vector<32x4xf32>, vector<32x4xf32>, vector<32x4xf32>, vector<32x4xf32>, vector<32x4xf32>, vector<32x4xf32>, vector<32x4xf32>, vector<32x4xf32> -> vector<256x4xf32>
    %84 = vector.shape_cast %83 : vector<256x4xf32> to vector<32x8x4xf32>
    %85 = vector.extract_strided_slice %62 {offsets = [0, 0], sizes = [32, 4], strides = [1, 1]} : vector<32x32xf32> to vector<32x4xf32>
    %86 = vector.extract_strided_slice %62 {offsets = [0, 4], sizes = [32, 4], strides = [1, 1]} : vector<32x32xf32> to vector<32x4xf32>
    %87 = vector.extract_strided_slice %62 {offsets = [0, 8], sizes = [32, 4], strides = [1, 1]} : vector<32x32xf32> to vector<32x4xf32>
    %88 = vector.extract_strided_slice %62 {offsets = [0, 12], sizes = [32, 4], strides = [1, 1]} : vector<32x32xf32> to vector<32x4xf32>
    %89 = vector.extract_strided_slice %62 {offsets = [0, 16], sizes = [32, 4], strides = [1, 1]} : vector<32x32xf32> to vector<32x4xf32>
    %90 = vector.extract_strided_slice %62 {offsets = [0, 20], sizes = [32, 4], strides = [1, 1]} : vector<32x32xf32> to vector<32x4xf32>
    %91 = vector.extract_strided_slice %62 {offsets = [0, 24], sizes = [32, 4], strides = [1, 1]} : vector<32x32xf32> to vector<32x4xf32>
    %92 = vector.extract_strided_slice %62 {offsets = [0, 28], sizes = [32, 4], strides = [1, 1]} : vector<32x32xf32> to vector<32x4xf32>
    %93 = tpu.concatenate %85, %86, %87, %88, %89, %90, %91, %92 in 0 : vector<32x4xf32>, vector<32x4xf32>, vector<32x4xf32>, vector<32x4xf32>, vector<32x4xf32>, vector<32x4xf32>, vector<32x4xf32>, vector<32x4xf32> -> vector<256x4xf32>
    %94 = vector.shape_cast %93 : vector<256x4xf32> to vector<32x8x4xf32>
    %95 = arith.truncf %74 : vector<32x8x4xf32> to vector<32x8x4xbf16>
    %96 = arith.truncf %84 : vector<32x8x4xf32> to vector<32x8x4xbf16>
    %cst_20 = arith.constant dense<0.000000e+00> : vector<32x8x8xf32>
    %97 = tpu.matmul %95, %96, %cst_20 {dimension_numbers = #tpu.dot_dimension_numbers<[2], [2], [1], [1], [0, 0, 0, 1, 1, 1], [0], [0]>} : vector<32x8x4xbf16>, vector<32x8x4xbf16>, vector<32x8x8xf32> -> vector<32x8x8xf32>
    %cst_21 = arith.constant dense<0xFF800000> : vector<32x8xf32>
    %98 = vector.multi_reduction <maximumf>, %97, %cst_21 [2] : vector<32x8x8xf32> to vector<32x8xf32>
    %99 = vector.shape_cast %98 : vector<32x8xf32> to vector<32x8x1xf32>
    %100 = vector.broadcast %99 : vector<32x8x1xf32> to vector<32x8x8xf32>
    %101 = arith.subf %97, %100 : vector<32x8x8xf32>
    %102 = math.exp %101 : vector<32x8x8xf32>
    %cst_22 = arith.constant dense<0.000000e+00> : vector<32x8xf32>
    %103 = vector.multi_reduction <add>, %102, %cst_22 [2] : vector<32x8x8xf32> to vector<32x8xf32>
    %104 = vector.shape_cast %103 : vector<32x8xf32> to vector<32x8x1xf32>
    %105 = tpu.reciprocal %104 {approx = true} : vector<32x8x1xf32> -> vector<32x8x1xf32>
    %106 = vector.broadcast %105 : vector<32x8x1xf32> to vector<32x8x8xf32>
    %107 = arith.mulf %102, %106 : vector<32x8x8xf32>
    %108 = arith.truncf %107 : vector<32x8x8xf32> to vector<32x8x8xbf16>
    %109 = arith.truncf %94 : vector<32x8x4xf32> to vector<32x8x4xbf16>
    %cst_23 = arith.constant dense<0.000000e+00> : vector<32x8x4xf32>
    %110 = tpu.matmul %108, %109, %cst_23 {dimension_numbers = #tpu.dot_dimension_numbers<[2], [1], [1], [2], [0, 0, 0, 1, 1, 2], [0], [0]>} : vector<32x8x8xbf16>, vector<32x8x4xbf16>, vector<32x8x4xf32> -> vector<32x8x4xf32>
    %111 = vector.shape_cast %110 : vector<32x8x4xf32> to vector<256x4xf32>
    %112 = vector.extract_strided_slice %111 {offsets = [0, 0], sizes = [32, 4], strides = [1, 1]} : vector<256x4xf32> to vector<32x4xf32>
    %113 = vector.extract_strided_slice %111 {offsets = [32, 0], sizes = [32, 4], strides = [1, 1]} : vector<256x4xf32> to vector<32x4xf32>
    %114 = vector.extract_strided_slice %111 {offsets = [64, 0], sizes = [32, 4], strides = [1, 1]} : vector<256x4xf32> to vector<32x4xf32>
    %115 = vector.extract_strided_slice %111 {offsets = [96, 0], sizes = [32, 4], strides = [1, 1]} : vector<256x4xf32> to vector<32x4xf32>
    %116 = vector.extract_strided_slice %111 {offsets = [128, 0], sizes = [32, 4], strides = [1, 1]} : vector<256x4xf32> to vector<32x4xf32>
    %117 = vector.extract_strided_slice %111 {offsets = [160, 0], sizes = [32, 4], strides = [1, 1]} : vector<256x4xf32> to vector<32x4xf32>
    %118 = vector.extract_strided_slice %111 {offsets = [192, 0], sizes = [32, 4], strides = [1, 1]} : vector<256x4xf32> to vector<32x4xf32>
    %119 = vector.extract_strided_slice %111 {offsets = [224, 0], sizes = [32, 4], strides = [1, 1]} : vector<256x4xf32> to vector<32x4xf32>
    %120 = tpu.concatenate %112, %113, %114, %115, %116, %117, %118, %119 in 1 : vector<32x4xf32>, vector<32x4xf32>, vector<32x4xf32>, vector<32x4xf32>, vector<32x4xf32>, vector<32x4xf32>, vector<32x4xf32>, vector<32x4xf32> -> vector<32x32xf32>
    %121 = vector.extract_strided_slice %0 {offsets = [136, 0], sizes = [32, 32], strides = [1, 1]} : vector<232x32xbf16> to vector<32x32xbf16>
    %122 = arith.truncf %120 : vector<32x32xf32> to vector<32x32xbf16>
    %cst_24 = arith.constant dense<0.000000e+00> : vector<32x32xf32>
    %123 = tpu.matmul %122, %121, %cst_24 {dimension_numbers = #tpu.dot_dimension_numbers<[1], [0], [0], [1], [0, 0, 1, 1], [], []>} : vector<32x32xbf16>, vector<32x32xbf16>, vector<32x32xf32> -> vector<32x32xf32>
    %124 = vector.broadcast %9 : vector<1x32xf32> to vector<32x32xf32>
    %125 = arith.addf %123, %124 : vector<32x32xf32>
    %126 = vector.extract_strided_slice %125 {offsets = [0, 0], sizes = [16, 32], strides = [1, 1]} : vector<32x32xf32> to vector<16x32xf32>
    %127 = vector.extract_strided_slice %125 {offsets = [16, 0], sizes = [16, 32], strides = [1, 1]} : vector<32x32xf32> to vector<16x32xf32>
    %128 = vector.extract_strided_slice %0 {offsets = [168, 0], sizes = [32, 32], strides = [1, 1]} : vector<232x32xbf16> to vector<32x32xbf16>
    %129 = arith.truncf %126 : vector<16x32xf32> to vector<16x32xbf16>
    %cst_25 = arith.constant dense<0.000000e+00> : vector<16x32xf32>
    %130 = tpu.matmul %129, %128, %cst_25 {dimension_numbers = #tpu.dot_dimension_numbers<[1], [0], [0], [1], [0, 0, 1, 1], [], []>} : vector<16x32xbf16>, vector<32x32xbf16>, vector<16x32xf32> -> vector<16x32xf32>
    %131 = vector.extract_strided_slice %0 {offsets = [200, 0], sizes = [32, 32], strides = [1, 1]} : vector<232x32xbf16> to vector<32x32xbf16>
    %132 = arith.truncf %127 : vector<16x32xf32> to vector<16x32xbf16>
    %cst_26 = arith.constant dense<0.000000e+00> : vector<16x32xf32>
    %133 = tpu.matmul %132, %131, %cst_26 {dimension_numbers = #tpu.dot_dimension_numbers<[1], [0], [0], [1], [0, 0, 1, 1], [], []>} : vector<16x32xbf16>, vector<32x32xbf16>, vector<16x32xf32> -> vector<16x32xf32>
    %134 = arith.addf %130, %133 : vector<16x32xf32>
    %135 = vector.broadcast %10 : vector<1x32xf32> to vector<16x32xf32>
    %136 = arith.addf %134, %135 : vector<16x32xf32>
    %137 = arith.negf %136 : vector<16x32xf32>
    %138 = math.exp %137 : vector<16x32xf32>
    %cst_27 = arith.constant 1.000000e+00 : f32
    %139 = vector.broadcast %cst_27 : f32 to vector<16x32xf32>
    %140 = arith.addf %139, %138 : vector<16x32xf32>
    %141 = arith.divf %139, %140 : vector<16x32xf32>
    %142 = arith.mulf %141, %126 : vector<16x32xf32>
    %cst_28 = arith.constant 1.000000e+00 : f32
    %143 = vector.broadcast %cst_28 : f32 to vector<16x32xf32>
    %144 = arith.subf %143, %141 : vector<16x32xf32>
    %145 = arith.mulf %144, %127 : vector<16x32xf32>
    %146 = arith.addf %142, %145 : vector<16x32xf32>
    %c0_29 = arith.constant 0 : index
    %c0_30 = arith.constant 0 : index
    %147 = vector.load %arg6[%c0_29, %c0_30] : memref<16x32xf32, #tpu.memory_space<vmem>>, vector<16x32xf32>
    tpu.vector_store %arg6[%c0_29, %c0_30], %146 {strides = array<i32>} : memref<16x32xf32, #tpu.memory_space<vmem>>, vector<16x32xf32>,
    return
  }
  func.func @transform_0(%arg0: i32) -> (i32, i32, i32) {
    %c0_i32 = arith.constant 0 : i32
    %c0_i32_0 = arith.constant 0 : i32
    %c0_i32_1 = arith.constant 0 : i32
    return %c0_i32, %arg0, %c0_i32_0 : i32, i32, i32
  }
  func.func @transform_1(%arg0: i32) -> (i32, i32) {
    %c0_i32 = arith.constant 0 : i32
    %c0_i32_0 = arith.constant 0 : i32
    return %arg0, %c0_i32 : i32, i32
  }
  func.func @transform_2(%arg0: i32) -> (i32, i32) {
    %c0_i32 = arith.constant 0 : i32
    %c0_i32_0 = arith.constant 0 : i32
    %c0_i32_1 = arith.constant 0 : i32
    return %c0_i32, %c0_i32_0 : i32, i32
  }
  func.func @transform_3(%arg0: i32) -> (i32, i32) {
    %c0_i32 = arith.constant 0 : i32
    %c0_i32_0 = arith.constant 0 : i32
    %c0_i32_1 = arith.constant 0 : i32
    return %c0_i32, %c0_i32_0 : i32, i32
  }
  func.func @transform_4(%arg0: i32) -> (i32, i32) {
    %c0_i32 = arith.constant 0 : i32
    %c0_i32_0 = arith.constant 0 : i32
    %c0_i32_1 = arith.constant 0 : i32
    return %c0_i32, %c0_i32_0 : i32, i32
  }
  func.func @transform_5(%arg0: i32) -> (i32, i32) {
    %c0_i32 = arith.constant 0 : i32
    %c0_i32_0 = arith.constant 0 : i32
    return %arg0, %c0_i32 : i32, i32
  }
}

</mosaic_0001>

<llo_original>
// kernel: tpu_custom_call.1
$region0: #{tpu_custom_call.1}
  #allocation0 [shape = 'u32[]', space=smem, size = 0x4, offset = 0x4, fixed_abs, tag = 'smem constant byte address 0x4 - core index']
  #allocation1 [shape = 'u32[72,128]{1,0:T(1,128)}', space=vmem, size = 0x9000, scoped, tag = 'internal scratch']
  %s0 = inlined_call_operand.vmem [shape: f32[2,16,32], index: 0, kind: input, shape index: {}]
  %s1 = inlined_call_operand.vmem [shape: f32[16,8], index: 1, kind: input, shape index: {}]
  %s2 = inlined_call_operand.vmem [shape: bf16[232,32], index: 2, kind: input, shape index: {}]
  %s3 = inlined_call_operand.vmem [shape: bf16[32,96], index: 3, kind: input, shape index: {}]
  %s4 = inlined_call_operand.vmem [shape: f32[72,32], index: 4, kind: input, shape index: {}]
  %s5 = inlined_call_operand.hbm [shape: f32[16,32], index: 5, kind: output, shape index: {}]
  %s6 = sld [smem:[#allocation0]]
  $region30: #{tpu_custom_call.1} parent=0
    _
  %s8 = ssub.s32 1, %s6
  %s9 = scalar_select 0, %s8, %s6
  $region1: #{tpu_custom_call.1} parent=0
    #allocation2 [shape = 'u8[8192]{0}', space=vmem, size = 0x2000, scoped, tag = 'output window, operand 0, single buffered']
    #allocation3 [shape = 's32[1]{0}', space=sflag, size = 0x4, scoped, tag = 'scoped memory for tpu_custom_call.1']
    %10 = vsyncpa [#allocation3], 0
    // Predicated region
    $region2: #{tpu_custom_call.1} parent=1 // pred_check
      _
    $region3: #{tpu_custom_call.1} parent=1 // pred_check_branch
      %12 = sbr.rel (0) target = $region5
    $region4: #{tpu_custom_call.1} parent=1 // pred_region
      _
    $region5: #{tpu_custom_call.1} parent=1 // pred_fallthru
      _
    // Predicated region
    $region6: #{tpu_custom_call.1} parent=1 // pred_check
      _
    $region7: #{tpu_custom_call.1} parent=1 // pred_check_branch
      %14 = sbr.rel (0) target = $region9
    $region8: #{tpu_custom_call.1} parent=1 // pred_region
      _
    $region9: #{tpu_custom_call.1} parent=1 // pred_fallthru
      _
    // Predicated region
    $region10: #{tpu_custom_call.1} parent=1 // pred_check
      _
    $region11: #{tpu_custom_call.1} parent=1 // pred_check_branch
      %16 = sbr.rel (0) target = $region13
    $region12: #{tpu_custom_call.1} parent=1 // pred_region
      _
    $region13: #{tpu_custom_call.1} parent=1 // pred_fallthru
      _
    // Predicated region
    $region14: #{tpu_custom_call.1} parent=1 // pred_check
      _
    $region15: #{tpu_custom_call.1} parent=1 // pred_check_branch
      %18 = sbr.rel (0) target = $region17
    $region16: #{tpu_custom_call.1} parent=1 // pred_region
      _
    $region17: #{tpu_custom_call.1} parent=1 // pred_fallthru
      _
    // Predicated region
    $region18: #{tpu_custom_call.1} parent=1 // pred_check
      _
    $region19: #{tpu_custom_call.1} parent=1 // pred_check_branch
      %20 = sbr.rel (0) target = $region21
    $region20: #{tpu_custom_call.1} parent=1 // pred_region
      _
    $region21: #{tpu_custom_call.1} parent=1 // pred_fallthru
      _
    %v22 = vld [vmem:[%s2] sm:$0xf]
    %v23 = vld [vmem:[%s2 + $0x4] sm:$0xf]
    %v24 = vld [vmem:[%s2 + $0x8] sm:$0xf]
    %v25 = vld [vmem:[%s2 + $0xc] sm:$0xf]
    %v26 = vld [vmem:[%s2 + $0x10] sm:$0xf]
    %v27 = vld [vmem:[%s2 + $0x14] sm:$0xf]
    %v28 = vld [vmem:[%s2 + $0x18] sm:$0xf]
    %v29 = vld [vmem:[%s2 + $0x1c] sm:$0xf]
    %v30 = vld [vmem:[%s2 + $0x20] sm:$0xf]
    %v31 = vld [vmem:[%s2 + $0x24] sm:$0xf]
    %v32 = vld [vmem:[%s2 + $0x28] sm:$0xf]
    %v33 = vld [vmem:[%s2 + $0x2c] sm:$0xf]
    %v34 = vld [vmem:[%s2 + $0x30] sm:$0xf]
    %v35 = vld [vmem:[%s2 + $0x34] sm:$0xf]
    %v36 = vld [vmem:[%s2 + $0x38] sm:$0xf]
    %v37 = vld [vmem:[%s2 + $0x3c] sm:$0xf]
    %v38 = vld [vmem:[%s2 + $0x40] sm:$0xf]
    %v39 = vld [vmem:[%s2 + $0x44] sm:$0xf]
    %v40 = vld [vmem:[%s2 + $0x48] sm:$0xf]
    %v41 = vld [vmem:[%s2 + $0x4c] sm:$0xf]
    %v42 = vld [vmem:[%s2 + $0x50] sm:$0xf]
    %v43 = vld [vmem:[%s2 + $0x54] sm:$0xf]
    %v44 = vld [vmem:[%s2 + $0x58] sm:$0xf]
    %v45 = vld [vmem:[%s2 + $0x5c] sm:$0xf]
    %v46 = vld [vmem:[%s2 + $0x60] sm:$0xf]
    %v47 = vld [vmem:[%s2 + $0x64] sm:$0xf]
    %v48 = vld [vmem:[%s2 + $0x68] sm:$0xf]
    %v49 = vld [vmem:[%s2 + $0x6c] sm:$0xf]
    %v50 = vld [vmem:[%s2 + $0x70] sm:$0xf]
    %v51 = vld [vmem:[%s4] sm:$0xff]
    %v52 = vld [vmem:[%s4 + $0x8] sm:$0xff]
    %v53 = vld [vmem:[%s4 + $0x10] sm:$0xff]
    %v54 = vld [vmem:[%s4 + $0x18] sm:$0xff]
    %v55 = vld [vmem:[%s4 + $0x20] sm:$0xff]
    %v56 = vld [vmem:[%s4 + $0x28] sm:$0xff]
    %v57 = vld [vmem:[%s4 + $0x30] sm:$0xff]
    %v58 = vld [vmem:[%s4 + $0x38] sm:$0xff]
    %v59 = vld [vmem:[%s4 + $0x40] sm:$0xff]
    %v60 = vld [vmem:[%s0] sm:$0xff]
    %v61 = vld [vmem:[%s0 + $0x8] sm:$0xff]
    %s62 = scalar_lea.vmem %s0, 16
    %v63 = vld [vmem:[%s62] sm:$0xff]
    %v64 = vld [vmem:[%s62 + $0x8] sm:$0xff]
    %v65 = vld [vmem:[%s1] sm:$0xff]
    %v66 = vld [vmem:[%s1 + $0x8] sm:$0xff]
    %v67 = vpack.c.bf16 %v61, %v60
    %v68 = vpack.c.bf16 %v66, %v65
    %vm69 = vcmask 64512
    %v71 = vsel %vm69, %v68, 0
    %vm73 = vcmask 1043456
    %v75 = vsel %vm73, %v26, 0
    %77 = vmatpush.bf16.msra.mxu0 0
    %78 = vmatpush.bf16.msra.mxu0 0
    %79 = vmatpush.bf16.msra.mxu0 0
    %80 = vmatpush.bf16.msra.mxu0 0
    %81 = vmatpush.bf16.msra.mxu0 0
    %82 = vmatpush.bf16.msra.mxu0 0
    %83 = vmatpush.bf16.msra.mxu0 0
    %84 = vmatpush.bf16.msra.mxu0 %v75
    %85 = vmatmul.bf16.gmra.mxu0 %v71
    %v86 = vpop.f32.mrf.mxu0
    %v87 = vadd.f32 0.0, %v86
    %v88 = vpop.f32.mrf.mxu0
    %v89 = vadd.f32 0.0, %v88
    %90 = vdwg.mxu0
    %v95 = vunpack.c.l.b16 %v22
    %v96 = vunpack.c.l.b16 %v23
    %v97 = vunpack.c.l.b16 %v24
    %v98 = vunpack.c.l.b16 %v25
    %v99 = vpack.c.b16 %v96, %v95
    %v100 = vpack.c.b16 %v98, %v97
    %vm103 = vcmask 261120
    %v105 = vsel %vm103, %v67, 0
    %107 = vmatpush.bf16.msra.mxu0 0
    %108 = vmatpush.bf16.msra.mxu0 0
    %109 = vmatpush.bf16.msra.mxu0 0
    %110 = vmatpush.bf16.msra.mxu0 0
    %111 = vmatpush.bf16.msra.mxu0 0
    %112 = vmatpush.bf16.msra.mxu0 0
    %113 = vmatpush.bf16.msra.mxu0 %v100
    %114 = vmatpush.bf16.msra.mxu0 %v99
    %115 = vmatmul.bf16.gmra.mxu0 %v105
    %v116 = vpop.f32.mrf.mxu0
    %v117 = vadd.f32 %v87, %v116
    %v118 = vpop.f32.mrf.mxu0
    %v119 = vadd.f32 %v89, %v118
    %120 = vdwg.mxu0
    %v121 = vperm.slane %v51, 0
    %v122 = vadd.f32 %v117, %v121
    %v123 = vadd.f32 %v119, %v121
    %v124 = vmax.f32 %v122, 0.0
    %v125 = vmax.f32 %v123, 0.0
    %v126 = vpack.c.bf16 %v125, %v124
    %v127 = vperm.slane %v52, 0
    %v132 = vunpack.c.l.b16 %v27
    %v133 = vunpack.c.l.b16 %v28
    %v134 = vunpack.c.l.b16 %v29
    %v135 = vunpack.c.l.b16 %v30
    %v136 = vpack.c.b16 %v133, %v132
    %v137 = vpack.c.b16 %v135, %v134
    %v141 = vsel %vm103, %v126, 0
    %143 = vmatpush.bf16.msra.mxu0 0
    %144 = vmatpush.bf16.msra.mxu0 0
    %145 = vmatpush.bf16.msra.mxu0 0
    %146 = vmatpush.bf16.msra.mxu0 0
    %147 = vmatpush.bf16.msra.mxu0 0
    %148 = vmatpush.bf16.msra.mxu0 0
    %149 = vmatpush.bf16.msra.mxu0 %v137
    %150 = vmatpush.bf16.msra.mxu0 %v136
    %151 = vmatmul.bf16.gmra.mxu0 %v141
    %v152 = vpop.f32.mrf.mxu0
    %v153 = vadd.f32 %v127, %v152
    %v154 = vpop.f32.mrf.mxu0
    %v155 = vadd.f32 %v127, %v154
    %156 = vdwg.mxu0
    %v157 = vpack.c.bf16 %v64, %v63
    %v158 = vperm.slane %v53, 0
    %v163 = vunpack.c.l.b16 %v31
    %v164 = vunpack.c.l.b16 %v32
    %v165 = vunpack.c.l.b16 %v33
    %v166 = vunpack.c.l.b16 %v34
    %v167 = vpack.c.b16 %v164, %v163
    %v168 = vpack.c.b16 %v166, %v165
    %v172 = vsel %vm103, %v157, 0
    %174 = vmatpush.bf16.msra.mxu0 0
    %175 = vmatpush.bf16.msra.mxu0 0
    %176 = vmatpush.bf16.msra.mxu0 0
    %177 = vmatpush.bf16.msra.mxu0 0
    %178 = vmatpush.bf16.msra.mxu0 0
    %179 = vmatpush.bf16.msra.mxu0 0
    %180 = vmatpush.bf16.msra.mxu0 %v168
    %181 = vmatpush.bf16.msra.mxu0 %v167
    %182 = vmatmul.bf16.gmra.mxu0 %v172
    %v183 = vpop.f32.mrf.mxu0
    %v184 = vadd.f32 %v158, %v183
    %v185 = vpop.f32.mrf.mxu0
    %v186 = vadd.f32 %v158, %v185
    %187 = vdwg.mxu0
    %v188 = vmax.f32 %v184, 0.0
    %v189 = vmax.f32 %v186, 0.0
    %v190 = vpack.c.bf16 %v189, %v188
    %v191 = vperm.slane %v54, 0
    %v196 = vunpack.c.l.b16 %v35
    %v197 = vunpack.c.l.b16 %v36
    %v198 = vunpack.c.l.b16 %v37
    %v199 = vunpack.c.l.b16 %v38
    %v200 = vpack.c.b16 %v197, %v196
    %v201 = vpack.c.b16 %v199, %v198
    %v205 = vsel %vm103, %v190, 0
    %207 = vmatpush.bf16.msra.mxu0 0
    %208 = vmatpush.bf16.msra.mxu0 0
    %209 = vmatpush.bf16.msra.mxu0 0
    %210 = vmatpush.bf16.msra.mxu0 0
    %211 = vmatpush.bf16.msra.mxu0 0
    %212 = vmatpush.bf16.msra.mxu0 0
    %213 = vmatpush.bf16.msra.mxu0 %v201
    %214 = vmatpush.bf16.msra.mxu0 %v200
    %215 = vmatmul.bf16.gmra.mxu0 %v205
    %v216 = vpop.f32.mrf.mxu0
    %v217 = vadd.f32 %v191, %v216
    %v218 = vpop.f32.mrf.mxu0
    %v219 = vadd.f32 %v191, %v218
    %220 = vdwg.mxu0
    %v221 = vld [vmem:[%s3] sm:$0xf]
    %v222 = vld [vmem:[%s3 + $0x4] sm:$0xf]
    %v223 = vld [vmem:[%s3 + $0x8] sm:$0xf]
    %v224 = vld [vmem:[%s3 + $0xc] sm:$0xf]
    %v225 = vpack.c.bf16 %v155, %v153
    %v226 = vpack.c.bf16 %v219, %v217
    %v231 = vunpack.c.l.b16 %v221
    %v232 = vunpack.c.l.b16 %v222
    %v233 = vunpack.c.l.b16 %v223
    %v234 = vunpack.c.l.b16 %v224
    %v235 = vpack.c.b16 %v232, %v231
    %v236 = vpack.c.b16 %v234, %v233
    %v240 = vsel %vm103, %v225, 0
    %v243 = vsel %vm103, %v226, 0
    %245 = vmatpush.bf16.msra.mxu0 0
    %246 = vmatpush.bf16.msra.mxu0 0
    %247 = vmatpush.bf16.msra.mxu0 0
    %248 = vmatpush.bf16.msra.mxu0 0
    %249 = vmatpush.bf16.msra.mxu0 0
    %250 = vmatpush.bf16.msra.mxu0 0
    %251 = vmatpush.bf16.msra.mxu0 %v236
    %252 = vmatpush.bf16.msra.mxu0 %v235
    %253 = vmatmul.bf16.gmra.mxu0 %v240
    %v254 = vpop.f32.mrf.mxu0
    %v255 = vadd.f32 0.0, %v254
    %v256 = vpop.f32.mrf.mxu0
    %v257 = vadd.f32 0.0, %v256
    %258 = vmatmul.bf16.gmra.mxu0 %v243
    %v259 = vpop.f32.mrf.mxu0
    %v260 = vadd.f32 0.0, %v259
    %v261 = vpop.f32.mrf.mxu0
    %v262 = vadd.f32 0.0, %v261
    %263 = vdwg.mxu0
    %v264 = vperm.slane %v55, 0
    %v265 = vadd.f32 %v255, %v264
    %v266 = vadd.f32 %v257, %v264
    %v267 = vadd.f32 %v260, %v264
    %v268 = vadd.f32 %v262, %v264
    %v269 = vperm.slane %v56, 0
    %271 = vrot.lane.b32.xlu0 %v269, 32
    %v272 = vpop.permute.xlu0 %271
    %v274 = vadd.f32 %v255, %v272
    %v275 = vadd.f32 %v257, %v272
    %v276 = vadd.f32 %v260, %v272
    %v277 = vadd.f32 %v262, %v272
    %v278 = vperm.slane %v57, 0
    %280 = vrot.lane.b32.xlu0 %v278, 64
    %v281 = vpop.permute.xlu0 %280
    %v283 = vadd.f32 %v255, %v281
    %v284 = vadd.f32 %v257, %v281
    %v285 = vadd.f32 %v260, %v281
    %v286 = vadd.f32 %v262, %v281
    %291 = vrot.lane.b32.xlu0 %v265, 124
    %v292 = vpop.permute.xlu0 %291
    %293 = vrot.lane.b32.xlu0 %v266, 124
    %v294 = vpop.permute.xlu0 %293
    %295 = vrot.lane.b32.xlu0 %v267, 124
    %v296 = vpop.permute.xlu0 %295
    %297 = vrot.lane.b32.xlu0 %v268, 124
    %v298 = vpop.permute.xlu0 %297
    %303 = vrot.lane.b32.xlu0 %v265, 120
    %v304 = vpop.permute.xlu0 %303
    %305 = vrot.lane.b32.xlu0 %v266, 120
    %v306 = vpop.permute.xlu0 %305
    %307 = vrot.lane.b32.xlu0 %v267, 120
    %v308 = vpop.permute.xlu0 %307
    %309 = vrot.lane.b32.xlu0 %v268, 120
    %v310 = vpop.permute.xlu0 %309
    %315 = vrot.lane.b32.xlu0 %v265, 116
    %v316 = vpop.permute.xlu0 %315
    %317 = vrot.lane.b32.xlu0 %v266, 116
    %v318 = vpop.permute.xlu0 %317
    %319 = vrot.lane.b32.xlu0 %v267, 116
    %v320 = vpop.permute.xlu0 %319
    %321 = vrot.lane.b32.xlu0 %v268, 116
    %v322 = vpop.permute.xlu0 %321
    %327 = vrot.lane.b32.xlu0 %v265, 112
    %v328 = vpop.permute.xlu0 %327
    %329 = vrot.lane.b32.xlu0 %v266, 112
    %v330 = vpop.permute.xlu0 %329
    %331 = vrot.lane.b32.xlu0 %v267, 112
    %v332 = vpop.permute.xlu0 %331
    %333 = vrot.lane.b32.xlu0 %v268, 112
    %v334 = vpop.permute.xlu0 %333
    %339 = vrot.lane.b32.xlu0 %v265, 108
    %v340 = vpop.permute.xlu0 %339
    %341 = vrot.lane.b32.xlu0 %v266, 108
    %v342 = vpop.permute.xlu0 %341
    %343 = vrot.lane.b32.xlu0 %v267, 108
    %v344 = vpop.permute.xlu0 %343
    %345 = vrot.lane.b32.xlu0 %v268, 108
    %v346 = vpop.permute.xlu0 %345
    %351 = vrot.lane.b32.xlu0 %v265, 104
    %v352 = vpop.permute.xlu0 %351
    %353 = vrot.lane.b32.xlu0 %v266, 104
    %v354 = vpop.permute.xlu0 %353
    %355 = vrot.lane.b32.xlu0 %v267, 104
    %v356 = vpop.permute.xlu0 %355
    %357 = vrot.lane.b32.xlu0 %v268, 104
    %v358 = vpop.permute.xlu0 %357
    %363 = vrot.lane.b32.xlu0 %v265, 100
    %v364 = vpop.permute.xlu0 %363
    %365 = vrot.lane.b32.xlu0 %v266, 100
    %v366 = vpop.permute.xlu0 %365
    %367 = vrot.lane.b32.xlu0 %v267, 100
    %v368 = vpop.permute.xlu0 %367
    %369 = vrot.lane.b32.xlu0 %v268, 100
    %v370 = vpop.permute.xlu0 %369
    %v375 = vmul.f32 %v265, 0.5
    %v376 = vmul.f32 %v266, 0.5
    %v377 = vmul.f32 %v267, 0.5
    %v378 = vmul.f32 %v268, 0.5
    %v379 = vmul.f32 %v292, 0.5
    %v380 = vmul.f32 %v294, 0.5
    %v381 = vmul.f32 %v296, 0.5
    %v382 = vmul.f32 %v298, 0.5
    %v383 = vmul.f32 %v304, 0.5
    %v384 = vmul.f32 %v306, 0.5
    %v385 = vmul.f32 %v308, 0.5
    %v386 = vmul.f32 %v310, 0.5
    %v387 = vmul.f32 %v316, 0.5
    %v388 = vmul.f32 %v318, 0.5
    %v389 = vmul.f32 %v320, 0.5
    %v390 = vmul.f32 %v322, 0.5
    %v391 = vmul.f32 %v328, 0.5
    %v392 = vmul.f32 %v330, 0.5
    %v393 = vmul.f32 %v332, 0.5
    %v394 = vmul.f32 %v334, 0.5
    %v395 = vmul.f32 %v340, 0.5
    %v396 = vmul.f32 %v342, 0.5
    %v397 = vmul.f32 %v344, 0.5
    %v398 = vmul.f32 %v346, 0.5
    %v399 = vmul.f32 %v352, 0.5
    %v400 = vmul.f32 %v354, 0.5
    %v401 = vmul.f32 %v356, 0.5
    %v402 = vmul.f32 %v358, 0.5
    %v403 = vmul.f32 %v364, 0.5
    %v404 = vmul.f32 %v366, 0.5
    %v405 = vmul.f32 %v368, 0.5
    %v406 = vmul.f32 %v370, 0.5
    %411 = vrot.lane.b32.xlu0 %v276, 124
    %v412 = vpop.permute.xlu0 %411
    %413 = vrot.lane.b32.xlu0 %v277, 124
    %v414 = vpop.permute.xlu0 %413
    %415 = vrot.lane.b32.xlu0 %v274, 124
    %v416 = vpop.permute.xlu0 %415
    %417 = vrot.lane.b32.xlu0 %v275, 124
    %v418 = vpop.permute.xlu0 %417
    %423 = vrot.lane.b32.xlu0 %v276, 120
    %v424 = vpop.permute.xlu0 %423
    %425 = vrot.lane.b32.xlu0 %v277, 120
    %v426 = vpop.permute.xlu0 %425
    %427 = vrot.lane.b32.xlu0 %v274, 120
    %v428 = vpop.permute.xlu0 %427
    %429 = vrot.lane.b32.xlu0 %v275, 120
    %v430 = vpop.permute.xlu0 %429
    %435 = vrot.lane.b32.xlu0 %v276, 116
    %v436 = vpop.permute.xlu0 %435
    %437 = vrot.lane.b32.xlu0 %v277, 116
    %v438 = vpop.permute.xlu0 %437
    %439 = vrot.lane.b32.xlu0 %v274, 116
    %v440 = vpop.permute.xlu0 %439
    %441 = vrot.lane.b32.xlu0 %v275, 116
    %v442 = vpop.permute.xlu0 %441
    %447 = vrot.lane.b32.xlu0 %v276, 112
    %v448 = vpop.permute.xlu0 %447
    %449 = vrot.lane.b32.xlu0 %v277, 112
    %v450 = vpop.permute.xlu0 %449
    %451 = vrot.lane.b32.xlu0 %v274, 112
    %v452 = vpop.permute.xlu0 %451
    %453 = vrot.lane.b32.xlu0 %v275, 112
    %v454 = vpop.permute.xlu0 %453
    %459 = vrot.lane.b32.xlu0 %v276, 108
    %v460 = vpop.permute.xlu0 %459
    %461 = vrot.lane.b32.xlu0 %v277, 108
    %v462 = vpop.permute.xlu0 %461
    %463 = vrot.lane.b32.xlu0 %v274, 108
    %v464 = vpop.permute.xlu0 %463
    %465 = vrot.lane.b32.xlu0 %v275, 108
    %v466 = vpop.permute.xlu0 %465
    %471 = vrot.lane.b32.xlu0 %v276, 104
    %v472 = vpop.permute.xlu0 %471
    %473 = vrot.lane.b32.xlu0 %v277, 104
    %v474 = vpop.permute.xlu0 %473
    %475 = vrot.lane.b32.xlu0 %v274, 104
    %v476 = vpop.permute.xlu0 %475
    %477 = vrot.lane.b32.xlu0 %v275, 104
    %v478 = vpop.permute.xlu0 %477
    %483 = vrot.lane.b32.xlu0 %v276, 100
    %v484 = vpop.permute.xlu0 %483
    %485 = vrot.lane.b32.xlu0 %v277, 100
    %v486 = vpop.permute.xlu0 %485
    %487 = vrot.lane.b32.xlu0 %v274, 100
    %v488 = vpop.permute.xlu0 %487
    %489 = vrot.lane.b32.xlu0 %v275, 100
    %v490 = vpop.permute.xlu0 %489
    %499 = vrot.lane.b32.xlu0 %v285, 124
    %v500 = vpop.permute.xlu0 %499
    %501 = vrot.lane.b32.xlu0 %v286, 124
    %v502 = vpop.permute.xlu0 %501
    %503 = vrot.lane.b32.xlu0 %v283, 124
    %v504 = vpop.permute.xlu0 %503
    %505 = vrot.lane.b32.xlu0 %v284, 124
    %v506 = vpop.permute.xlu0 %505
    %511 = vrot.lane.b32.xlu0 %v285, 120
    %v512 = vpop.permute.xlu0 %511
    %513 = vrot.lane.b32.xlu0 %v286, 120
    %v514 = vpop.permute.xlu0 %513
    %515 = vrot.lane.b32.xlu0 %v283, 120
    %v516 = vpop.permute.xlu0 %515
    %517 = vrot.lane.b32.xlu0 %v284, 120
    %v518 = vpop.permute.xlu0 %517
    %523 = vrot.lane.b32.xlu0 %v285, 116
    %v524 = vpop.permute.xlu0 %523
    %525 = vrot.lane.b32.xlu0 %v286, 116
    %v526 = vpop.permute.xlu0 %525
    %527 = vrot.lane.b32.xlu0 %v283, 116
    %v528 = vpop.permute.xlu0 %527
    %529 = vrot.lane.b32.xlu0 %v284, 116
    %v530 = vpop.permute.xlu0 %529
    %535 = vrot.lane.b32.xlu0 %v285, 112
    %v536 = vpop.permute.xlu0 %535
    %537 = vrot.lane.b32.xlu0 %v286, 112
    %v538 = vpop.permute.xlu0 %537
    %539 = vrot.lane.b32.xlu0 %v283, 112
    %v540 = vpop.permute.xlu0 %539
    %541 = vrot.lane.b32.xlu0 %v284, 112
    %v542 = vpop.permute.xlu0 %541
    %547 = vrot.lane.b32.xlu0 %v285, 108
    %v548 = vpop.permute.xlu0 %547
    %549 = vrot.lane.b32.xlu0 %v286, 108
    %v550 = vpop.permute.xlu0 %549
    %551 = vrot.lane.b32.xlu0 %v283, 108
    %v552 = vpop.permute.xlu0 %551
    %553 = vrot.lane.b32.xlu0 %v284, 108
    %v554 = vpop.permute.xlu0 %553
    %559 = vrot.lane.b32.xlu0 %v285, 104
    %v560 = vpop.permute.xlu0 %559
    %561 = vrot.lane.b32.xlu0 %v286, 104
    %v562 = vpop.permute.xlu0 %561
    %563 = vrot.lane.b32.xlu0 %v283, 104
    %v564 = vpop.permute.xlu0 %563
    %565 = vrot.lane.b32.xlu0 %v284, 104
    %v566 = vpop.permute.xlu0 %565
    %571 = vrot.lane.b32.xlu0 %v285, 100
    %v572 = vpop.permute.xlu0 %571
    %573 = vrot.lane.b32.xlu0 %v286, 100
    %v574 = vpop.permute.xlu0 %573
    %575 = vrot.lane.b32.xlu0 %v283, 100
    %v576 = vpop.permute.xlu0 %575
    %577 = vrot.lane.b32.xlu0 %v284, 100
    %v578 = vpop.permute.xlu0 %577
    %v583 = vpack.c.bf16 %v375, %v375
    %v584 = vpack.c.bf16 %v376, %v376
    %v585 = vpack.c.bf16 %v377, %v377
    %v586 = vpack.c.bf16 %v378, %v378
    %v587 = vpack.c.bf16 %v379, %v379
    %v588 = vpack.c.bf16 %v380, %v380
    %v589 = vpack.c.bf16 %v381, %v381
    %v590 = vpack.c.bf16 %v382, %v382
    %v591 = vpack.c.bf16 %v383, %v383
    %v592 = vpack.c.bf16 %v384, %v384
    %v593 = vpack.c.bf16 %v385, %v385
    %v594 = vpack.c.bf16 %v386, %v386
    %v595 = vpack.c.bf16 %v387, %v387
    %v596 = vpack.c.bf16 %v388, %v388
    %v597 = vpack.c.bf16 %v389, %v389
    %v598 = vpack.c.bf16 %v390, %v390
    %v599 = vpack.c.bf16 %v391, %v391
    %v600 = vpack.c.bf16 %v392, %v392
    %v601 = vpack.c.bf16 %v393, %v393
    %v602 = vpack.c.bf16 %v394, %v394
    %v603 = vpack.c.bf16 %v395, %v395
    %v604 = vpack.c.bf16 %v396, %v396
    %v605 = vpack.c.bf16 %v397, %v397
    %v606 = vpack.c.bf16 %v398, %v398
    %v607 = vpack.c.bf16 %v399, %v399
    %v608 = vpack.c.bf16 %v400, %v400
    %v609 = vpack.c.bf16 %v401, %v401
    %v610 = vpack.c.bf16 %v402, %v402
    %v611 = vpack.c.bf16 %v403, %v403
    %v612 = vpack.c.bf16 %v404, %v404
    %v613 = vpack.c.bf16 %v405, %v405
    %v614 = vpack.c.bf16 %v406, %v406
    %v615 = vpack.c.bf16 %v276, %v276
    %v616 = vpack.c.bf16 %v277, %v277
    %v617 = vpack.c.bf16 %v274, %v274
    %v618 = vpack.c.bf16 %v275, %v275
    %v619 = vpack.c.bf16 %v412, %v412
    %v620 = vpack.c.bf16 %v414, %v414
    %v621 = vpack.c.bf16 %v416, %v416
    %v622 = vpack.c.bf16 %v418, %v418
    %v623 = vpack.c.bf16 %v424, %v424
    %v624 = vpack.c.bf16 %v426, %v426
    %v625 = vpack.c.bf16 %v428, %v428
    %v626 = vpack.c.bf16 %v430, %v430
    %v627 = vpack.c.bf16 %v436, %v436
    %v628 = vpack.c.bf16 %v438, %v438
    %v629 = vpack.c.bf16 %v440, %v440
    %v630 = vpack.c.bf16 %v442, %v442
    %v631 = vpack.c.bf16 %v448, %v448
    %v632 = vpack.c.bf16 %v450, %v450
    %v633 = vpack.c.bf16 %v452, %v452
    %v634 = vpack.c.bf16 %v454, %v454
    %v635 = vpack.c.bf16 %v460, %v460
    %v636 = vpack.c.bf16 %v462, %v462
    %v637 = vpack.c.bf16 %v464, %v464
    %v638 = vpack.c.bf16 %v466, %v466
    %v639 = vpack.c.bf16 %v472, %v472
    %v640 = vpack.c.bf16 %v474, %v474
    %v641 = vpack.c.bf16 %v476, %v476
    %v642 = vpack.c.bf16 %v478, %v478
    %v643 = vpack.c.bf16 %v484, %v484
    %v644 = vpack.c.bf16 %v486, %v486
    %v645 = vpack.c.bf16 %v488, %v488
    %v646 = vpack.c.bf16 %v490, %v490
    %v648 = vunpack.c.l.b16 %v615
    %v649 = vpack.c.b16 %v648, %v648
    %650 = vrot.lane.b32.xlu0 %v649, 96
    %v651 = vpop.permute.xlu0 %650
    %vm652 = vcmask 31744
    %v654 = vsel %vm652, %v583, 0
    %v657 = vsel %vm652, %v651, 0
    %659 = vmatpush.bf16.xpose.msra.mxu0 0
    %660 = vmatpush.bf16.xpose.msra.mxu0 0
    %661 = vmatpush.bf16.xpose.msra.mxu0 0
    %662 = vmatpush.bf16.xpose.msra.mxu0 0
    %663 = vmatpush.bf16.xpose.msra.mxu0 0
    %664 = vmatpush.bf16.xpose.msra.mxu0 0
    %665 = vmatpush.bf16.xpose.msra.mxu0 0
    %666 = vmatpush.bf16.xpose.msra.mxu0 %v657
    %667 = vmatmul.bf16.gmra.mxu0 %v654
    %v668 = vpop.f32.mrf.mxu0
    %v669 = vadd.f32 0.0, %v668
    %v670 = vpop.f32.mrf.mxu0
    %671 = vdwg.mxu0
    %v673 = vunpack.c.l.b16 %v616
    %v674 = vpack.c.b16 %v673, %v673
    %675 = vrot.lane.b32.xlu0 %v674, 96
    %v676 = vpop.permute.xlu0 %675
    %v678 = vsel %vm652, %v584, 0
    %v681 = vsel %vm652, %v676, 0
    %683 = vmatpush.bf16.xpose.msra.mxu0 0
    %684 = vmatpush.bf16.xpose.msra.mxu0 0
    %685 = vmatpush.bf16.xpose.msra.mxu0 0
    %686 = vmatpush.bf16.xpose.msra.mxu0 0
    %687 = vmatpush.bf16.xpose.msra.mxu0 0
    %688 = vmatpush.bf16.xpose.msra.mxu0 0
    %689 = vmatpush.bf16.xpose.msra.mxu0 0
    %690 = vmatpush.bf16.xpose.msra.mxu0 %v681
    %691 = vmatmul.bf16.gmra.mxu0 %v678
    %v692 = vpop.f32.mrf.mxu0
    %v693 = vadd.f32 0.0, %v692
    %v694 = vpop.f32.mrf.mxu0
    %695 = vdwg.mxu0
    %v697 = vunpack.c.l.b16 %v617
    %v698 = vpack.c.b16 %v697, %v697
    %699 = vrot.lane.b32.xlu0 %v698, 96
    %v700 = vpop.permute.xlu0 %699
    %v702 = vsel %vm652, %v585, 0
    %v705 = vsel %vm652, %v700, 0
    %707 = vmatpush.bf16.xpose.msra.mxu0 0
    %708 = vmatpush.bf16.xpose.msra.mxu0 0
    %709 = vmatpush.bf16.xpose.msra.mxu0 0
    %710 = vmatpush.bf16.xpose.msra.mxu0 0
    %711 = vmatpush.bf16.xpose.msra.mxu0 0
    %712 = vmatpush.bf16.xpose.msra.mxu0 0
    %713 = vmatpush.bf16.xpose.msra.mxu0 0
    %714 = vmatpush.bf16.xpose.msra.mxu0 %v705
    %715 = vmatmul.bf16.gmra.mxu0 %v702
    %v716 = vpop.f32.mrf.mxu0
    %v717 = vadd.f32 0.0, %v716
    %v718 = vpop.f32.mrf.mxu0
    %719 = vdwg.mxu0
    %v721 = vunpack.c.l.b16 %v618
    %v722 = vpack.c.b16 %v721, %v721
    %723 = vrot.lane.b32.xlu0 %v722, 96
    %v724 = vpop.permute.xlu0 %723
    %v726 = vsel %vm652, %v586, 0
    %v729 = vsel %vm652, %v724, 0
    %731 = vmatpush.bf16.xpose.msra.mxu0 0
    %732 = vmatpush.bf16.xpose.msra.mxu0 0
    %733 = vmatpush.bf16.xpose.msra.mxu0 0
    %734 = vmatpush.bf16.xpose.msra.mxu0 0
    %735 = vmatpush.bf16.xpose.msra.mxu0 0
    %736 = vmatpush.bf16.xpose.msra.mxu0 0
    %737 = vmatpush.bf16.xpose.msra.mxu0 0
    %738 = vmatpush.bf16.xpose.msra.mxu0 %v729
    %739 = vmatmul.bf16.gmra.mxu0 %v726
    %v740 = vpop.f32.mrf.mxu0
    %v741 = vadd.f32 0.0, %v740
    %v742 = vpop.f32.mrf.mxu0
    %743 = vdwg.mxu0
    %v745 = vunpack.c.l.b16 %v619
    %v746 = vpack.c.b16 %v745, %v745
    %747 = vrot.lane.b32.xlu0 %v746, 96
    %v748 = vpop.permute.xlu0 %747
    %v750 = vsel %vm652, %v587, 0
    %v753 = vsel %vm652, %v748, 0
    %755 = vmatpush.bf16.xpose.msra.mxu0 0
    %756 = vmatpush.bf16.xpose.msra.mxu0 0
    %757 = vmatpush.bf16.xpose.msra.mxu0 0
    %758 = vmatpush.bf16.xpose.msra.mxu0 0
    %759 = vmatpush.bf16.xpose.msra.mxu0 0
    %760 = vmatpush.bf16.xpose.msra.mxu0 0
    %761 = vmatpush.bf16.xpose.msra.mxu0 0
    %762 = vmatpush.bf16.xpose.msra.mxu0 %v753
    %763 = vmatmul.bf16.gmra.mxu0 %v750
    %v764 = vpop.f32.mrf.mxu0
    %v765 = vadd.f32 0.0, %v764
    %v766 = vpop.f32.mrf.mxu0
    %767 = vdwg.mxu0
    %v769 = vunpack.c.l.b16 %v620
    %v770 = vpack.c.b16 %v769, %v769
    %771 = vrot.lane.b32.xlu0 %v770, 96
    %v772 = vpop.permute.xlu0 %771
    %v774 = vsel %vm652, %v588, 0
    %v777 = vsel %vm652, %v772, 0
    %779 = vmatpush.bf16.xpose.msra.mxu0 0
    %780 = vmatpush.bf16.xpose.msra.mxu0 0
    %781 = vmatpush.bf16.xpose.msra.mxu0 0
    %782 = vmatpush.bf16.xpose.msra.mxu0 0
    %783 = vmatpush.bf16.xpose.msra.mxu0 0
    %784 = vmatpush.bf16.xpose.msra.mxu0 0
    %785 = vmatpush.bf16.xpose.msra.mxu0 0
    %786 = vmatpush.bf16.xpose.msra.mxu0 %v777
    %787 = vmatmul.bf16.gmra.mxu0 %v774
    %v788 = vpop.f32.mrf.mxu0
    %v789 = vadd.f32 0.0, %v788
    %v790 = vpop.f32.mrf.mxu0
    %791 = vdwg.mxu0
    %v793 = vunpack.c.l.b16 %v621
    %v794 = vpack.c.b16 %v793, %v793
    %795 = vrot.lane.b32.xlu0 %v794, 96
    %v796 = vpop.permute.xlu0 %795
    %v798 = vsel %vm652, %v589, 0
    %v801 = vsel %vm652, %v796, 0
    %803 = vmatpush.bf16.xpose.msra.mxu0 0
    %804 = vmatpush.bf16.xpose.msra.mxu0 0
    %805 = vmatpush.bf16.xpose.msra.mxu0 0
    %806 = vmatpush.bf16.xpose.msra.mxu0 0
    %807 = vmatpush.bf16.xpose.msra.mxu0 0
    %808 = vmatpush.bf16.xpose.msra.mxu0 0
    %809 = vmatpush.bf16.xpose.msra.mxu0 0
    %810 = vmatpush.bf16.xpose.msra.mxu0 %v801
    %811 = vmatmul.bf16.gmra.mxu0 %v798
    %v812 = vpop.f32.mrf.mxu0
    %v813 = vadd.f32 0.0, %v812
    %v814 = vpop.f32.mrf.mxu0
    %815 = vdwg.mxu0
    %v817 = vunpack.c.l.b16 %v622
    %v818 = vpack.c.b16 %v817, %v817
    %819 = vrot.lane.b32.xlu0 %v818, 96
    %v820 = vpop.permute.xlu0 %819
    %v822 = vsel %vm652, %v590, 0
    %v825 = vsel %vm652, %v820, 0
    %827 = vmatpush.bf16.xpose.msra.mxu0 0
    %828 = vmatpush.bf16.xpose.msra.mxu0 0
    %829 = vmatpush.bf16.xpose.msra.mxu0 0
    %830 = vmatpush.bf16.xpose.msra.mxu0 0
    %831 = vmatpush.bf16.xpose.msra.mxu0 0
    %832 = vmatpush.bf16.xpose.msra.mxu0 0
    %833 = vmatpush.bf16.xpose.msra.mxu0 0
    %834 = vmatpush.bf16.xpose.msra.mxu0 %v825
    %835 = vmatmul.bf16.gmra.mxu0 %v822
    %v836 = vpop.f32.mrf.mxu0
    %v837 = vadd.f32 0.0, %v836
    %v838 = vpop.f32.mrf.mxu0
    %839 = vdwg.mxu0
    %v841 = vunpack.c.l.b16 %v623
    %v842 = vpack.c.b16 %v841, %v841
    %843 = vrot.lane.b32.xlu0 %v842, 96
    %v844 = vpop.permute.xlu0 %843
    %v846 = vsel %vm652, %v591, 0
    %v849 = vsel %vm652, %v844, 0
    %851 = vmatpush.bf16.xpose.msra.mxu0 0
    %852 = vmatpush.bf16.xpose.msra.mxu0 0
    %853 = vmatpush.bf16.xpose.msra.mxu0 0
    %854 = vmatpush.bf16.xpose.msra.mxu0 0
    %855 = vmatpush.bf16.xpose.msra.mxu0 0
    %856 = vmatpush.bf16.xpose.msra.mxu0 0
    %857 = vmatpush.bf16.xpose.msra.mxu0 0
    %858 = vmatpush.bf16.xpose.msra.mxu0 %v849
    %859 = vmatmul.bf16.gmra.mxu0 %v846
    %v860 = vpop.f32.mrf.mxu0
    %v861 = vadd.f32 0.0, %v860
    %v862 = vpop.f32.mrf.mxu0
    %863 = vdwg.mxu0
    %v865 = vunpack.c.l.b16 %v624
    %v866 = vpack.c.b16 %v865, %v865
    %867 = vrot.lane.b32.xlu0 %v866, 96
    %v868 = vpop.permute.xlu0 %867
    %v870 = vsel %vm652, %v592, 0
    %v873 = vsel %vm652, %v868, 0
    %875 = vmatpush.bf16.xpose.msra.mxu0 0
    %876 = vmatpush.bf16.xpose.msra.mxu0 0
    %877 = vmatpush.bf16.xpose.msra.mxu0 0
    %878 = vmatpush.bf16.xpose.msra.mxu0 0
    %879 = vmatpush.bf16.xpose.msra.mxu0 0
    %880 = vmatpush.bf16.xpose.msra.mxu0 0
    %881 = vmatpush.bf16.xpose.msra.mxu0 0
    %882 = vmatpush.bf16.xpose.msra.mxu0 %v873
    %883 = vmatmul.bf16.gmra.mxu0 %v870
    %v884 = vpop.f32.mrf.mxu0
    %v885 = vadd.f32 0.0, %v884
    %v886 = vpop.f32.mrf.mxu0
    %887 = vdwg.mxu0
    %v889 = vunpack.c.l.b16 %v625
    %v890 = vpack.c.b16 %v889, %v889
    %891 = vrot.lane.b32.xlu0 %v890, 96
    %v892 = vpop.permute.xlu0 %891
    %v894 = vsel %vm652, %v593, 0
    %v897 = vsel %vm652, %v892, 0
    %899 = vmatpush.bf16.xpose.msra.mxu0 0
    %900 = vmatpush.bf16.xpose.msra.mxu0 0
    %901 = vmatpush.bf16.xpose.msra.mxu0 0
    %902 = vmatpush.bf16.xpose.msra.mxu0 0
    %903 = vmatpush.bf16.xpose.msra.mxu0 0
    %904 = vmatpush.bf16.xpose.msra.mxu0 0
    %905 = vmatpush.bf16.xpose.msra.mxu0 0
    %906 = vmatpush.bf16.xpose.msra.mxu0 %v897
    %907 = vmatmul.bf16.gmra.mxu0 %v894
    %v908 = vpop.f32.mrf.mxu0
    %v909 = vadd.f32 0.0, %v908
    %v910 = vpop.f32.mrf.mxu0
    %911 = vdwg.mxu0
    %v913 = vunpack.c.l.b16 %v626
    %v914 = vpack.c.b16 %v913, %v913
    %915 = vrot.lane.b32.xlu0 %v914, 96
    %v916 = vpop.permute.xlu0 %915
    %v918 = vsel %vm652, %v594, 0
    %v921 = vsel %vm652, %v916, 0
    %923 = vmatpush.bf16.xpose.msra.mxu0 0
    %924 = vmatpush.bf16.xpose.msra.mxu0 0
    %925 = vmatpush.bf16.xpose.msra.mxu0 0
    %926 = vmatpush.bf16.xpose.msra.mxu0 0
    %927 = vmatpush.bf16.xpose.msra.mxu0 0
    %928 = vmatpush.bf16.xpose.msra.mxu0 0
    %929 = vmatpush.bf16.xpose.msra.mxu0 0
    %930 = vmatpush.bf16.xpose.msra.mxu0 %v921
    %931 = vmatmul.bf16.gmra.mxu0 %v918
    %v932 = vpop.f32.mrf.mxu0
    %v933 = vadd.f32 0.0, %v932
    %v934 = vpop.f32.mrf.mxu0
    %935 = vdwg.mxu0
    %v937 = vunpack.c.l.b16 %v627
    %v938 = vpack.c.b16 %v937, %v937
    %939 = vrot.lane.b32.xlu0 %v938, 96
    %v940 = vpop.permute.xlu0 %939
    %v942 = vsel %vm652, %v595, 0
    %v945 = vsel %vm652, %v940, 0
    %947 = vmatpush.bf16.xpose.msra.mxu0 0
    %948 = vmatpush.bf16.xpose.msra.mxu0 0
    %949 = vmatpush.bf16.xpose.msra.mxu0 0
    %950 = vmatpush.bf16.xpose.msra.mxu0 0
    %951 = vmatpush.bf16.xpose.msra.mxu0 0
    %952 = vmatpush.bf16.xpose.msra.mxu0 0
    %953 = vmatpush.bf16.xpose.msra.mxu0 0
    %954 = vmatpush.bf16.xpose.msra.mxu0 %v945
    %955 = vmatmul.bf16.gmra.mxu0 %v942
    %v956 = vpop.f32.mrf.mxu0
    %v957 = vadd.f32 0.0, %v956
    %v958 = vpop.f32.mrf.mxu0
    %959 = vdwg.mxu0
    %v961 = vunpack.c.l.b16 %v628
    %v962 = vpack.c.b16 %v961, %v961
    %963 = vrot.lane.b32.xlu0 %v962, 96
    %v964 = vpop.permute.xlu0 %963
    %v966 = vsel %vm652, %v596, 0
    %v969 = vsel %vm652, %v964, 0
    %971 = vmatpush.bf16.xpose.msra.mxu0 0
    %972 = vmatpush.bf16.xpose.msra.mxu0 0
    %973 = vmatpush.bf16.xpose.msra.mxu0 0
    %974 = vmatpush.bf16.xpose.msra.mxu0 0
    %975 = vmatpush.bf16.xpose.msra.mxu0 0
    %976 = vmatpush.bf16.xpose.msra.mxu0 0
    %977 = vmatpush.bf16.xpose.msra.mxu0 0
    %978 = vmatpush.bf16.xpose.msra.mxu0 %v969
    %979 = vmatmul.bf16.gmra.mxu0 %v966
    %v980 = vpop.f32.mrf.mxu0
    %v981 = vadd.f32 0.0, %v980
    %v982 = vpop.f32.mrf.mxu0
    %983 = vdwg.mxu0
    %v985 = vunpack.c.l.b16 %v629
    %v986 = vpack.c.b16 %v985, %v985
    %987 = vrot.lane.b32.xlu0 %v986, 96
    %v988 = vpop.permute.xlu0 %987
    %v990 = vsel %vm652, %v597, 0
    %v993 = vsel %vm652, %v988, 0
    %995 = vmatpush.bf16.xpose.msra.mxu0 0
    %996 = vmatpush.bf16.xpose.msra.mxu0 0
    %997 = vmatpush.bf16.xpose.msra.mxu0 0
    %998 = vmatpush.bf16.xpose.msra.mxu0 0
    %999 = vmatpush.bf16.xpose.msra.mxu0 0
    %1000 = vmatpush.bf16.xpose.msra.mxu0 0
    %1001 = vmatpush.bf16.xpose.msra.mxu0 0
    %1002 = vmatpush.bf16.xpose.msra.mxu0 %v993
    %1003 = vmatmul.bf16.gmra.mxu0 %v990
    %v1004 = vpop.f32.mrf.mxu0
    %v1005 = vadd.f32 0.0, %v1004
    %v1006 = vpop.f32.mrf.mxu0
    %1007 = vdwg.mxu0
    %v1009 = vunpack.c.l.b16 %v630
    %v1010 = vpack.c.b16 %v1009, %v1009
    %1011 = vrot.lane.b32.xlu0 %v1010, 96
    %v1012 = vpop.permute.xlu0 %1011
    %v1014 = vsel %vm652, %v598, 0
    %v1017 = vsel %vm652, %v1012, 0
    %1019 = vmatpush.bf16.xpose.msra.mxu0 0
    %1020 = vmatpush.bf16.xpose.msra.mxu0 0
    %1021 = vmatpush.bf16.xpose.msra.mxu0 0
    %1022 = vmatpush.bf16.xpose.msra.mxu0 0
    %1023 = vmatpush.bf16.xpose.msra.mxu0 0
    %1024 = vmatpush.bf16.xpose.msra.mxu0 0
    %1025 = vmatpush.bf16.xpose.msra.mxu0 0
    %1026 = vmatpush.bf16.xpose.msra.mxu0 %v1017
    %1027 = vmatmul.bf16.gmra.mxu0 %v1014
    %v1028 = vpop.f32.mrf.mxu0
    %v1029 = vadd.f32 0.0, %v1028
    %v1030 = vpop.f32.mrf.mxu0
    %1031 = vdwg.mxu0
    %v1033 = vunpack.c.l.b16 %v631
    %v1034 = vpack.c.b16 %v1033, %v1033
    %1035 = vrot.lane.b32.xlu0 %v1034, 96
    %v1036 = vpop.permute.xlu0 %1035
    %v1038 = vsel %vm652, %v599, 0
    %v1041 = vsel %vm652, %v1036, 0
    %1043 = vmatpush.bf16.xpose.msra.mxu0 0
    %1044 = vmatpush.bf16.xpose.msra.mxu0 0
    %1045 = vmatpush.bf16.xpose.msra.mxu0 0
    %1046 = vmatpush.bf16.xpose.msra.mxu0 0
    %1047 = vmatpush.bf16.xpose.msra.mxu0 0
    %1048 = vmatpush.bf16.xpose.msra.mxu0 0
    %1049 = vmatpush.bf16.xpose.msra.mxu0 0
    %1050 = vmatpush.bf16.xpose.msra.mxu0 %v1041
    %1051 = vmatmul.bf16.gmra.mxu0 %v1038
    %v1052 = vpop.f32.mrf.mxu0
    %v1053 = vadd.f32 0.0, %v1052
    %v1054 = vpop.f32.mrf.mxu0
    %1055 = vdwg.mxu0
    %v1057 = vunpack.c.l.b16 %v632
    %v1058 = vpack.c.b16 %v1057, %v1057
    %1059 = vrot.lane.b32.xlu0 %v1058, 96
    %v1060 = vpop.permute.xlu0 %1059
    %v1062 = vsel %vm652, %v600, 0
    %v1065 = vsel %vm652, %v1060, 0
    %1067 = vmatpush.bf16.xpose.msra.mxu0 0
    %1068 = vmatpush.bf16.xpose.msra.mxu0 0
    %1069 = vmatpush.bf16.xpose.msra.mxu0 0
    %1070 = vmatpush.bf16.xpose.msra.mxu0 0
    %1071 = vmatpush.bf16.xpose.msra.mxu0 0
    %1072 = vmatpush.bf16.xpose.msra.mxu0 0
    %1073 = vmatpush.bf16.xpose.msra.mxu0 0
    %1074 = vmatpush.bf16.xpose.msra.mxu0 %v1065
    %1075 = vmatmul.bf16.gmra.mxu0 %v1062
    %v1076 = vpop.f32.mrf.mxu0
    %v1077 = vadd.f32 0.0, %v1076
    %v1078 = vpop.f32.mrf.mxu0
    %1079 = vdwg.mxu0
    %v1081 = vunpack.c.l.b16 %v633
    %v1082 = vpack.c.b16 %v1081, %v1081
    %1083 = vrot.lane.b32.xlu0 %v1082, 96
    %v1084 = vpop.permute.xlu0 %1083
    %v1086 = vsel %vm652, %v601, 0
    %v1089 = vsel %vm652, %v1084, 0
    %1091 = vmatpush.bf16.xpose.msra.mxu0 0
    %1092 = vmatpush.bf16.xpose.msra.mxu0 0
    %1093 = vmatpush.bf16.xpose.msra.mxu0 0
    %1094 = vmatpush.bf16.xpose.msra.mxu0 0
    %1095 = vmatpush.bf16.xpose.msra.mxu0 0
    %1096 = vmatpush.bf16.xpose.msra.mxu0 0
    %1097 = vmatpush.bf16.xpose.msra.mxu0 0
    %1098 = vmatpush.bf16.xpose.msra.mxu0 %v1089
    %1099 = vmatmul.bf16.gmra.mxu0 %v1086
    %v1100 = vpop.f32.mrf.mxu0
    %v1101 = vadd.f32 0.0, %v1100
    %v1102 = vpop.f32.mrf.mxu0
    %1103 = vdwg.mxu0
    %v1105 = vunpack.c.l.b16 %v634
    %v1106 = vpack.c.b16 %v1105, %v1105
    %1107 = vrot.lane.b32.xlu0 %v1106, 96
    %v1108 = vpop.permute.xlu0 %1107
    %v1110 = vsel %vm652, %v602, 0
    %v1113 = vsel %vm652, %v1108, 0
    %1115 = vmatpush.bf16.xpose.msra.mxu0 0
    %1116 = vmatpush.bf16.xpose.msra.mxu0 0
    %1117 = vmatpush.bf16.xpose.msra.mxu0 0
    %1118 = vmatpush.bf16.xpose.msra.mxu0 0
    %1119 = vmatpush.bf16.xpose.msra.mxu0 0
    %1120 = vmatpush.bf16.xpose.msra.mxu0 0
    %1121 = vmatpush.bf16.xpose.msra.mxu0 0
    %1122 = vmatpush.bf16.xpose.msra.mxu0 %v1113
    %1123 = vmatmul.bf16.gmra.mxu0 %v1110
    %v1124 = vpop.f32.mrf.mxu0
    %v1125 = vadd.f32 0.0, %v1124
    %v1126 = vpop.f32.mrf.mxu0
    %1127 = vdwg.mxu0
    %v1129 = vunpack.c.l.b16 %v635
    %v1130 = vpack.c.b16 %v1129, %v1129
    %1131 = vrot.lane.b32.xlu0 %v1130, 96
    %v1132 = vpop.permute.xlu0 %1131
    %v1134 = vsel %vm652, %v603, 0
    %v1137 = vsel %vm652, %v1132, 0
    %1139 = vmatpush.bf16.xpose.msra.mxu0 0
    %1140 = vmatpush.bf16.xpose.msra.mxu0 0
    %1141 = vmatpush.bf16.xpose.msra.mxu0 0
    %1142 = vmatpush.bf16.xpose.msra.mxu0 0
    %1143 = vmatpush.bf16.xpose.msra.mxu0 0
    %1144 = vmatpush.bf16.xpose.msra.mxu0 0
    %1145 = vmatpush.bf16.xpose.msra.mxu0 0
    %1146 = vmatpush.bf16.xpose.msra.mxu0 %v1137
    %1147 = vmatmul.bf16.gmra.mxu0 %v1134
    %v1148 = vpop.f32.mrf.mxu0
    %v1149 = vadd.f32 0.0, %v1148
    %v1150 = vpop.f32.mrf.mxu0
    %1151 = vdwg.mxu0
    %v1153 = vunpack.c.l.b16 %v636
    %v1154 = vpack.c.b16 %v1153, %v1153
    %1155 = vrot.lane.b32.xlu0 %v1154, 96
    %v1156 = vpop.permute.xlu0 %1155
    %v1158 = vsel %vm652, %v604, 0
    %v1161 = vsel %vm652, %v1156, 0
    %1163 = vmatpush.bf16.xpose.msra.mxu0 0
    %1164 = vmatpush.bf16.xpose.msra.mxu0 0
    %1165 = vmatpush.bf16.xpose.msra.mxu0 0
    %1166 = vmatpush.bf16.xpose.msra.mxu0 0
    %1167 = vmatpush.bf16.xpose.msra.mxu0 0
    %1168 = vmatpush.bf16.xpose.msra.mxu0 0
    %1169 = vmatpush.bf16.xpose.msra.mxu0 0
    %1170 = vmatpush.bf16.xpose.msra.mxu0 %v1161
    %1171 = vmatmul.bf16.gmra.mxu0 %v1158
    %v1172 = vpop.f32.mrf.mxu0
    %v1173 = vadd.f32 0.0, %v1172
    %v1174 = vpop.f32.mrf.mxu0
    %1175 = vdwg.mxu0
    %v1177 = vunpack.c.l.b16 %v637
    %v1178 = vpack.c.b16 %v1177, %v1177
    %1179 = vrot.lane.b32.xlu0 %v1178, 96
    %v1180 = vpop.permute.xlu0 %1179
    %v1182 = vsel %vm652, %v605, 0
    %v1185 = vsel %vm652, %v1180, 0
    %1187 = vmatpush.bf16.xpose.msra.mxu0 0
    %1188 = vmatpush.bf16.xpose.msra.mxu0 0
    %1189 = vmatpush.bf16.xpose.msra.mxu0 0
    %1190 = vmatpush.bf16.xpose.msra.mxu0 0
    %1191 = vmatpush.bf16.xpose.msra.mxu0 0
    %1192 = vmatpush.bf16.xpose.msra.mxu0 0
    %1193 = vmatpush.bf16.xpose.msra.mxu0 0
    %1194 = vmatpush.bf16.xpose.msra.mxu0 %v1185
    %1195 = vmatmul.bf16.gmra.mxu0 %v1182
    %v1196 = vpop.f32.mrf.mxu0
    %v1197 = vadd.f32 0.0, %v1196
    %v1198 = vpop.f32.mrf.mxu0
    %1199 = vdwg.mxu0
    %v1201 = vunpack.c.l.b16 %v638
    %v1202 = vpack.c.b16 %v1201, %v1201
    %1203 = vrot.lane.b32.xlu0 %v1202, 96
    %v1204 = vpop.permute.xlu0 %1203
    %v1206 = vsel %vm652, %v606, 0
    %v1209 = vsel %vm652, %v1204, 0
    %1211 = vmatpush.bf16.xpose.msra.mxu0 0
    %1212 = vmatpush.bf16.xpose.msra.mxu0 0
    %1213 = vmatpush.bf16.xpose.msra.mxu0 0
    %1214 = vmatpush.bf16.xpose.msra.mxu0 0
    %1215 = vmatpush.bf16.xpose.msra.mxu0 0
    %1216 = vmatpush.bf16.xpose.msra.mxu0 0
    %1217 = vmatpush.bf16.xpose.msra.mxu0 0
    %1218 = vmatpush.bf16.xpose.msra.mxu0 %v1209
    %1219 = vmatmul.bf16.gmra.mxu0 %v1206
    %v1220 = vpop.f32.mrf.mxu0
    %v1221 = vadd.f32 0.0, %v1220
    %v1222 = vpop.f32.mrf.mxu0
    %1223 = vdwg.mxu0
    %v1225 = vunpack.c.l.b16 %v639
    %v1226 = vpack.c.b16 %v1225, %v1225
    %1227 = vrot.lane.b32.xlu0 %v1226, 96
    %v1228 = vpop.permute.xlu0 %1227
    %v1230 = vsel %vm652, %v607, 0
    %v1233 = vsel %vm652, %v1228, 0
    %1235 = vmatpush.bf16.xpose.msra.mxu0 0
    %1236 = vmatpush.bf16.xpose.msra.mxu0 0
    %1237 = vmatpush.bf16.xpose.msra.mxu0 0
    %1238 = vmatpush.bf16.xpose.msra.mxu0 0
    %1239 = vmatpush.bf16.xpose.msra.mxu0 0
    %1240 = vmatpush.bf16.xpose.msra.mxu0 0
    %1241 = vmatpush.bf16.xpose.msra.mxu0 0
    %1242 = vmatpush.bf16.xpose.msra.mxu0 %v1233
    %1243 = vmatmul.bf16.gmra.mxu0 %v1230
    %v1244 = vpop.f32.mrf.mxu0
    %v1245 = vadd.f32 0.0, %v1244
    %v1246 = vpop.f32.mrf.mxu0
    %1247 = vdwg.mxu0
    %v1249 = vunpack.c.l.b16 %v640
    %v1250 = vpack.c.b16 %v1249, %v1249
    %1251 = vrot.lane.b32.xlu0 %v1250, 96
    %v1252 = vpop.permute.xlu0 %1251
    %v1254 = vsel %vm652, %v608, 0
    %v1257 = vsel %vm652, %v1252, 0
    %1259 = vmatpush.bf16.xpose.msra.mxu0 0
    %1260 = vmatpush.bf16.xpose.msra.mxu0 0
    %1261 = vmatpush.bf16.xpose.msra.mxu0 0
    %1262 = vmatpush.bf16.xpose.msra.mxu0 0
    %1263 = vmatpush.bf16.xpose.msra.mxu0 0
    %1264 = vmatpush.bf16.xpose.msra.mxu0 0
    %1265 = vmatpush.bf16.xpose.msra.mxu0 0
    %1266 = vmatpush.bf16.xpose.msra.mxu0 %v1257
    %1267 = vmatmul.bf16.gmra.mxu0 %v1254
    %v1268 = vpop.f32.mrf.mxu0
    %v1269 = vadd.f32 0.0, %v1268
    %v1270 = vpop.f32.mrf.mxu0
    %1271 = vdwg.mxu0
    %v1273 = vunpack.c.l.b16 %v641
    %v1274 = vpack.c.b16 %v1273, %v1273
    %1275 = vrot.lane.b32.xlu0 %v1274, 96
    %v1276 = vpop.permute.xlu0 %1275
    %v1278 = vsel %vm652, %v609, 0
    %v1281 = vsel %vm652, %v1276, 0
    %1283 = vmatpush.bf16.xpose.msra.mxu0 0
    %1284 = vmatpush.bf16.xpose.msra.mxu0 0
    %1285 = vmatpush.bf16.xpose.msra.mxu0 0
    %1286 = vmatpush.bf16.xpose.msra.mxu0 0
    %1287 = vmatpush.bf16.xpose.msra.mxu0 0
    %1288 = vmatpush.bf16.xpose.msra.mxu0 0
    %1289 = vmatpush.bf16.xpose.msra.mxu0 0
    %1290 = vmatpush.bf16.xpose.msra.mxu0 %v1281
    %1291 = vmatmul.bf16.gmra.mxu0 %v1278
    %v1292 = vpop.f32.mrf.mxu0
    %v1293 = vadd.f32 0.0, %v1292
    %v1294 = vpop.f32.mrf.mxu0
    %1295 = vdwg.mxu0
    %v1297 = vunpack.c.l.b16 %v642
    %v1298 = vpack.c.b16 %v1297, %v1297
    %1299 = vrot.lane.b32.xlu0 %v1298, 96
    %v1300 = vpop.permute.xlu0 %1299
    %v1302 = vsel %vm652, %v610, 0
    %v1305 = vsel %vm652, %v1300, 0
    %1307 = vmatpush.bf16.xpose.msra.mxu0 0
    %1308 = vmatpush.bf16.xpose.msra.mxu0 0
    %1309 = vmatpush.bf16.xpose.msra.mxu0 0
    %1310 = vmatpush.bf16.xpose.msra.mxu0 0
    %1311 = vmatpush.bf16.xpose.msra.mxu0 0
    %1312 = vmatpush.bf16.xpose.msra.mxu0 0
    %1313 = vmatpush.bf16.xpose.msra.mxu0 0
    %1314 = vmatpush.bf16.xpose.msra.mxu0 %v1305
    %1315 = vmatmul.bf16.gmra.mxu0 %v1302
    %v1316 = vpop.f32.mrf.mxu0
    %v1317 = vadd.f32 0.0, %v1316
    %v1318 = vpop.f32.mrf.mxu0
    %1319 = vdwg.mxu0
    %v1321 = vunpack.c.l.b16 %v643
    %v1322 = vpack.c.b16 %v1321, %v1321
    %1323 = vrot.lane.b32.xlu0 %v1322, 96
    %v1324 = vpop.permute.xlu0 %1323
    %v1326 = vsel %vm652, %v611, 0
    %v1329 = vsel %vm652, %v1324, 0
    %1331 = vmatpush.bf16.xpose.msra.mxu0 0
    %1332 = vmatpush.bf16.xpose.msra.mxu0 0
    %1333 = vmatpush.bf16.xpose.msra.mxu0 0
    %1334 = vmatpush.bf16.xpose.msra.mxu0 0
    %1335 = vmatpush.bf16.xpose.msra.mxu0 0
    %1336 = vmatpush.bf16.xpose.msra.mxu0 0
    %1337 = vmatpush.bf16.xpose.msra.mxu0 0
    %1338 = vmatpush.bf16.xpose.msra.mxu0 %v1329
    %1339 = vmatmul.bf16.gmra.mxu0 %v1326
    %v1340 = vpop.f32.mrf.mxu0
    %v1341 = vadd.f32 0.0, %v1340
    %v1342 = vpop.f32.mrf.mxu0
    %1343 = vdwg.mxu0
    %v1345 = vunpack.c.l.b16 %v644
    %v1346 = vpack.c.b16 %v1345, %v1345
    %1347 = vrot.lane.b32.xlu0 %v1346, 96
    %v1348 = vpop.permute.xlu0 %1347
    %v1350 = vsel %vm652, %v612, 0
    %v1353 = vsel %vm652, %v1348, 0
    %1355 = vmatpush.bf16.xpose.msra.mxu0 0
    %1356 = vmatpush.bf16.xpose.msra.mxu0 0
    %1357 = vmatpush.bf16.xpose.msra.mxu0 0
    %1358 = vmatpush.bf16.xpose.msra.mxu0 0
    %1359 = vmatpush.bf16.xpose.msra.mxu0 0
    %1360 = vmatpush.bf16.xpose.msra.mxu0 0
    %1361 = vmatpush.bf16.xpose.msra.mxu0 0
    %1362 = vmatpush.bf16.xpose.msra.mxu0 %v1353
    %1363 = vmatmul.bf16.gmra.mxu0 %v1350
    %v1364 = vpop.f32.mrf.mxu0
    %v1365 = vadd.f32 0.0, %v1364
    %v1366 = vpop.f32.mrf.mxu0
    %1367 = vdwg.mxu0
    %v1369 = vunpack.c.l.b16 %v645
    %v1370 = vpack.c.b16 %v1369, %v1369
    %1371 = vrot.lane.b32.xlu0 %v1370, 96
    %v1372 = vpop.permute.xlu0 %1371
    %v1374 = vsel %vm652, %v613, 0
    %v1377 = vsel %vm652, %v1372, 0
    %1379 = vmatpush.bf16.xpose.msra.mxu0 0
    %1380 = vmatpush.bf16.xpose.msra.mxu0 0
    %1381 = vmatpush.bf16.xpose.msra.mxu0 0
    %1382 = vmatpush.bf16.xpose.msra.mxu0 0
    %1383 = vmatpush.bf16.xpose.msra.mxu0 0
    %1384 = vmatpush.bf16.xpose.msra.mxu0 0
    %1385 = vmatpush.bf16.xpose.msra.mxu0 0
    %1386 = vmatpush.bf16.xpose.msra.mxu0 %v1377
    %1387 = vmatmul.bf16.gmra.mxu0 %v1374
    %v1388 = vpop.f32.mrf.mxu0
    %v1389 = vadd.f32 0.0, %v1388
    %v1390 = vpop.f32.mrf.mxu0
    %1391 = vdwg.mxu0
    %v1393 = vunpack.c.l.b16 %v646
    %v1394 = vpack.c.b16 %v1393, %v1393
    %1395 = vrot.lane.b32.xlu0 %v1394, 96
    %v1396 = vpop.permute.xlu0 %1395
    %v1398 = vsel %vm652, %v614, 0
    %v1401 = vsel %vm652, %v1396, 0
    %1403 = vmatpush.bf16.xpose.msra.mxu0 0
    %1404 = vmatpush.bf16.xpose.msra.mxu0 0
    %1405 = vmatpush.bf16.xpose.msra.mxu0 0
    %1406 = vmatpush.bf16.xpose.msra.mxu0 0
    %1407 = vmatpush.bf16.xpose.msra.mxu0 0
    %1408 = vmatpush.bf16.xpose.msra.mxu0 0
    %1409 = vmatpush.bf16.xpose.msra.mxu0 0
    %1410 = vmatpush.bf16.xpose.msra.mxu0 %v1401
    %1411 = vmatmul.bf16.gmra.mxu0 %v1398
    %v1412 = vpop.f32.mrf.mxu0
    %v1413 = vadd.f32 0.0, %v1412
    %v1414 = vpop.f32.mrf.mxu0
    %1415 = vdwg.mxu0
    %v1416 = vsel %vm69, %v669, -inf
    %1417 = vmax.xlane.f32.xlu0 %v1416
    %v1418 = vpop.xlane.xlu0 %1417
    %v1419 = vsel %vm69, %v693, -inf
    %1420 = vmax.xlane.f32.xlu0 %v1419
    %v1421 = vpop.xlane.xlu0 %1420
    %v1422 = vsel %vm69, %v717, -inf
    %1423 = vmax.xlane.f32.xlu0 %v1422
    %v1424 = vpop.xlane.xlu0 %1423
    %v1425 = vsel %vm69, %v741, -inf
    %1426 = vmax.xlane.f32.xlu0 %v1425
    %v1427 = vpop.xlane.xlu0 %1426
    %v1428 = vsel %vm69, %v765, -inf
    %1429 = vmax.xlane.f32.xlu0 %v1428
    %v1430 = vpop.xlane.xlu0 %1429
    %v1431 = vsel %vm69, %v789, -inf
    %1432 = vmax.xlane.f32.xlu0 %v1431
    %v1433 = vpop.xlane.xlu0 %1432
    %v1434 = vsel %vm69, %v813, -inf
    %1435 = vmax.xlane.f32.xlu0 %v1434
    %v1436 = vpop.xlane.xlu0 %1435
    %v1437 = vsel %vm69, %v837, -inf
    %1438 = vmax.xlane.f32.xlu0 %v1437
    %v1439 = vpop.xlane.xlu0 %1438
    %v1440 = vsel %vm69, %v861, -inf
    %1441 = vmax.xlane.f32.xlu0 %v1440
    %v1442 = vpop.xlane.xlu0 %1441
    %v1443 = vsel %vm69, %v885, -inf
    %1444 = vmax.xlane.f32.xlu0 %v1443
    %v1445 = vpop.xlane.xlu0 %1444
    %v1446 = vsel %vm69, %v909, -inf
    %1447 = vmax.xlane.f32.xlu0 %v1446
    %v1448 = vpop.xlane.xlu0 %1447
    %v1449 = vsel %vm69, %v933, -inf
    %1450 = vmax.xlane.f32.xlu0 %v1449
    %v1451 = vpop.xlane.xlu0 %1450
    %v1452 = vsel %vm69, %v957, -inf
    %1453 = vmax.xlane.f32.xlu0 %v1452
    %v1454 = vpop.xlane.xlu0 %1453
    %v1455 = vsel %vm69, %v981, -inf
    %1456 = vmax.xlane.f32.xlu0 %v1455
    %v1457 = vpop.xlane.xlu0 %1456
    %v1458 = vsel %vm69, %v1005, -inf
    %1459 = vmax.xlane.f32.xlu0 %v1458
    %v1460 = vpop.xlane.xlu0 %1459
    %v1461 = vsel %vm69, %v1029, -inf
    %1462 = vmax.xlane.f32.xlu0 %v1461
    %v1463 = vpop.xlane.xlu0 %1462
    %v1464 = vsel %vm69, %v1053, -inf
    %1465 = vmax.xlane.f32.xlu0 %v1464
    %v1466 = vpop.xlane.xlu0 %1465
    %v1467 = vsel %vm69, %v1077, -inf
    %1468 = vmax.xlane.f32.xlu0 %v1467
    %v1469 = vpop.xlane.xlu0 %1468
    %v1470 = vsel %vm69, %v1101, -inf
    %1471 = vmax.xlane.f32.xlu0 %v1470
    %v1472 = vpop.xlane.xlu0 %1471
    %v1473 = vsel %vm69, %v1125, -inf
    %1474 = vmax.xlane.f32.xlu0 %v1473
    %v1475 = vpop.xlane.xlu0 %1474
    %v1476 = vsel %vm69, %v1149, -inf
    %1477 = vmax.xlane.f32.xlu0 %v1476
    %v1478 = vpop.xlane.xlu0 %1477
    %v1479 = vsel %vm69, %v1173, -inf
    %1480 = vmax.xlane.f32.xlu0 %v1479
    %v1481 = vpop.xlane.xlu0 %1480
    %v1482 = vsel %vm69, %v1197, -inf
    %1483 = vmax.xlane.f32.xlu0 %v1482
    %v1484 = vpop.xlane.xlu0 %1483
    %v1485 = vsel %vm69, %v1221, -inf
    %1486 = vmax.xlane.f32.xlu0 %v1485
    %v1487 = vpop.xlane.xlu0 %1486
    %v1488 = vsel %vm69, %v1245, -inf
    %1489 = vmax.xlane.f32.xlu0 %v1488
    %v1490 = vpop.xlane.xlu0 %1489
    %v1491 = vsel %vm69, %v1269, -inf
    %1492 = vmax.xlane.f32.xlu0 %v1491
    %v1493 = vpop.xlane.xlu0 %1492
    %v1494 = vsel %vm69, %v1293, -inf
    %1495 = vmax.xlane.f32.xlu0 %v1494
    %v1496 = vpop.xlane.xlu0 %1495
    %v1497 = vsel %vm69, %v1317, -inf
    %1498 = vmax.xlane.f32.xlu0 %v1497
    %v1499 = vpop.xlane.xlu0 %1498
    %v1500 = vsel %vm69, %v1341, -inf
    %1501 = vmax.xlane.f32.xlu0 %v1500
    %v1502 = vpop.xlane.xlu0 %1501
    %v1503 = vsel %vm69, %v1365, -inf
    %1504 = vmax.xlane.f32.xlu0 %v1503
    %v1505 = vpop.xlane.xlu0 %1504
    %v1506 = vsel %vm69, %v1389, -inf
    %1507 = vmax.xlane.f32.xlu0 %v1506
    %v1508 = vpop.xlane.xlu0 %1507
    %v1509 = vsel %vm69, %v1413, -inf
    %1510 = vmax.xlane.f32.xlu0 %v1509
    %v1511 = vpop.xlane.xlu0 %1510
    %v1512 = vsub.f32 %v669, %v1418
    %v1513 = vsub.f32 %v693, %v1421
    %v1514 = vsub.f32 %v717, %v1424
    %v1515 = vsub.f32 %v741, %v1427
    %v1516 = vsub.f32 %v765, %v1430
    %v1517 = vsub.f32 %v789, %v1433
    %v1518 = vsub.f32 %v813, %v1436
    %v1519 = vsub.f32 %v837, %v1439
    %v1520 = vsub.f32 %v861, %v1442
    %v1521 = vsub.f32 %v885, %v1445
    %v1522 = vsub.f32 %v909, %v1448
    %v1523 = vsub.f32 %v933, %v1451
    %v1524 = vsub.f32 %v957, %v1454
    %v1525 = vsub.f32 %v981, %v1457
    %v1526 = vsub.f32 %v1005, %v1460
    %v1527 = vsub.f32 %v1029, %v1463
    %v1528 = vsub.f32 %v1053, %v1466
    %v1529 = vsub.f32 %v1077, %v1469
    %v1530 = vsub.f32 %v1101, %v1472
    %v1531 = vsub.f32 %v1125, %v1475
    %v1532 = vsub.f32 %v1149, %v1478
    %v1533 = vsub.f32 %v1173, %v1481
    %v1534 = vsub.f32 %v1197, %v1484
    %v1535 = vsub.f32 %v1221, %v1487
    %v1536 = vsub.f32 %v1245, %v1490
    %v1537 = vsub.f32 %v1269, %v1493
    %v1538 = vsub.f32 %v1293, %v1496
    %v1539 = vsub.f32 %v1317, %v1499
    %v1540 = vsub.f32 %v1341, %v1502
    %v1541 = vsub.f32 %v1365, %v1505
    %v1542 = vsub.f32 %v1389, %v1508
    %v1543 = vsub.f32 %v1413, %v1511
    %v1544 = vmul.f32 %v1512, 1.442695
    %v1545 = vpow.pop %v1544
    %v1546 = vmul.f32 %v1513, 1.442695
    %v1547 = vpow.pop %v1546
    %v1548 = vmul.f32 %v1514, 1.442695
    %v1549 = vpow.pop %v1548
    %v1550 = vmul.f32 %v1515, 1.442695
    %v1551 = vpow.pop %v1550
    %v1552 = vmul.f32 %v1516, 1.442695
    %v1553 = vpow.pop %v1552
    %v1554 = vmul.f32 %v1517, 1.442695
    %v1555 = vpow.pop %v1554
    %v1556 = vmul.f32 %v1518, 1.442695
    %v1557 = vpow.pop %v1556
    %v1558 = vmul.f32 %v1519, 1.442695
    %v1559 = vpow.pop %v1558
    %v1560 = vmul.f32 %v1520, 1.442695
    %v1561 = vpow.pop %v1560
    %v1562 = vmul.f32 %v1521, 1.442695
    %v1563 = vpow.pop %v1562
    %v1564 = vmul.f32 %v1522, 1.442695
    %v1565 = vpow.pop %v1564
    %v1566 = vmul.f32 %v1523, 1.442695
    %v1567 = vpow.pop %v1566
    %v1568 = vmul.f32 %v1524, 1.442695
    %v1569 = vpow.pop %v1568
    %v1570 = vmul.f32 %v1525, 1.442695
    %v1571 = vpow.pop %v1570
    %v1572 = vmul.f32 %v1526, 1.442695
    %v1573 = vpow.pop %v1572
    %v1574 = vmul.f32 %v1527, 1.442695
    %v1575 = vpow.pop %v1574
    %v1576 = vmul.f32 %v1528, 1.442695
    %v1577 = vpow.pop %v1576
    %v1578 = vmul.f32 %v1529, 1.442695
    %v1579 = vpow.pop %v1578
    %v1580 = vmul.f32 %v1530, 1.442695
    %v1581 = vpow.pop %v1580
    %v1582 = vmul.f32 %v1531, 1.442695
    %v1583 = vpow.pop %v1582
    %v1584 = vmul.f32 %v1532, 1.442695
    %v1585 = vpow.pop %v1584
    %v1586 = vmul.f32 %v1533, 1.442695
    %v1587 = vpow.pop %v1586
    %v1588 = vmul.f32 %v1534, 1.442695
    %v1589 = vpow.pop %v1588
    %v1590 = vmul.f32 %v1535, 1.442695
    %v1591 = vpow.pop %v1590
    %v1592 = vmul.f32 %v1536, 1.442695
    %v1593 = vpow.pop %v1592
    %v1594 = vmul.f32 %v1537, 1.442695
    %v1595 = vpow.pop %v1594
    %v1596 = vmul.f32 %v1538, 1.442695
    %v1597 = vpow.pop %v1596
    %v1598 = vmul.f32 %v1539, 1.442695
    %v1599 = vpow.pop %v1598
    %v1600 = vmul.f32 %v1540, 1.442695
    %v1601 = vpow.pop %v1600
    %v1602 = vmul.f32 %v1541, 1.442695
    %v1603 = vpow.pop %v1602
    %v1604 = vmul.f32 %v1542, 1.442695
    %v1605 = vpow.pop %v1604
    %v1606 = vmul.f32 %v1543, 1.442695
    %v1607 = vpow.pop %v1606
    %v1608 = vsel %vm69, %v1545, 0.0
    %1609 = vadd.xlane.f32.xlu0 %v1608
    %v1610 = vpop.xlane.xlu0 %1609
    %v1611 = vsel %vm69, %v1547, 0.0
    %1612 = vadd.xlane.f32.xlu0 %v1611
    %v1613 = vpop.xlane.xlu0 %1612
    %v1614 = vsel %vm69, %v1549, 0.0
    %1615 = vadd.xlane.f32.xlu0 %v1614
    %v1616 = vpop.xlane.xlu0 %1615
    %v1617 = vsel %vm69, %v1551, 0.0
    %1618 = vadd.xlane.f32.xlu0 %v1617
    %v1619 = vpop.xlane.xlu0 %1618
    %v1620 = vsel %vm69, %v1553, 0.0
    %1621 = vadd.xlane.f32.xlu0 %v1620
    %v1622 = vpop.xlane.xlu0 %1621
    %v1623 = vsel %vm69, %v1555, 0.0
    %1624 = vadd.xlane.f32.xlu0 %v1623
    %v1625 = vpop.xlane.xlu0 %1624
    %v1626 = vsel %vm69, %v1557, 0.0
    %1627 = vadd.xlane.f32.xlu0 %v1626
    %v1628 = vpop.xlane.xlu0 %1627
    %v1629 = vsel %vm69, %v1559, 0.0
    %1630 = vadd.xlane.f32.xlu0 %v1629
    %v1631 = vpop.xlane.xlu0 %1630
    %v1632 = vsel %vm69, %v1561, 0.0
    %1633 = vadd.xlane.f32.xlu0 %v1632
    %v1634 = vpop.xlane.xlu0 %1633
    %v1635 = vsel %vm69, %v1563, 0.0
    %1636 = vadd.xlane.f32.xlu0 %v1635
    %v1637 = vpop.xlane.xlu0 %1636
    %v1638 = vsel %vm69, %v1565, 0.0
    %1639 = vadd.xlane.f32.xlu0 %v1638
    %v1640 = vpop.xlane.xlu0 %1639
    %v1641 = vsel %vm69, %v1567, 0.0
    %1642 = vadd.xlane.f32.xlu0 %v1641
    %v1643 = vpop.xlane.xlu0 %1642
    %v1644 = vsel %vm69, %v1569, 0.0
    %1645 = vadd.xlane.f32.xlu0 %v1644
    %v1646 = vpop.xlane.xlu0 %1645
    %v1647 = vsel %vm69, %v1571, 0.0
    %1648 = vadd.xlane.f32.xlu0 %v1647
    %v1649 = vpop.xlane.xlu0 %1648
    %v1650 = vsel %vm69, %v1573, 0.0
    %1651 = vadd.xlane.f32.xlu0 %v1650
    %v1652 = vpop.xlane.xlu0 %1651
    %v1653 = vsel %vm69, %v1575, 0.0
    %1654 = vadd.xlane.f32.xlu0 %v1653
    %v1655 = vpop.xlane.xlu0 %1654
    %v1656 = vsel %vm69, %v1577, 0.0
    %1657 = vadd.xlane.f32.xlu0 %v1656
    %v1658 = vpop.xlane.xlu0 %1657
    %v1659 = vsel %vm69, %v1579, 0.0
    %1660 = vadd.xlane.f32.xlu0 %v1659
    %v1661 = vpop.xlane.xlu0 %1660
    %v1662 = vsel %vm69, %v1581, 0.0
    %1663 = vadd.xlane.f32.xlu0 %v1662
    %v1664 = vpop.xlane.xlu0 %1663
    %v1665 = vsel %vm69, %v1583, 0.0
    %1666 = vadd.xlane.f32.xlu0 %v1665
    %v1667 = vpop.xlane.xlu0 %1666
    %v1668 = vsel %vm69, %v1585, 0.0
    %1669 = vadd.xlane.f32.xlu0 %v1668
    %v1670 = vpop.xlane.xlu0 %1669
    %v1671 = vsel %vm69, %v1587, 0.0
    %1672 = vadd.xlane.f32.xlu0 %v1671
    %v1673 = vpop.xlane.xlu0 %1672
    %v1674 = vsel %vm69, %v1589, 0.0
    %1675 = vadd.xlane.f32.xlu0 %v1674
    %v1676 = vpop.xlane.xlu0 %1675
    %v1677 = vsel %vm69, %v1591, 0.0
    %1678 = vadd.xlane.f32.xlu0 %v1677
    %v1679 = vpop.xlane.xlu0 %1678
    %v1680 = vsel %vm69, %v1593, 0.0
    %1681 = vadd.xlane.f32.xlu0 %v1680
    %v1682 = vpop.xlane.xlu0 %1681
    %v1683 = vsel %vm69, %v1595, 0.0
    %1684 = vadd.xlane.f32.xlu0 %v1683
    %v1685 = vpop.xlane.xlu0 %1684
    %v1686 = vsel %vm69, %v1597, 0.0
    %1687 = vadd.xlane.f32.xlu0 %v1686
    %v1688 = vpop.xlane.xlu0 %1687
    %v1689 = vsel %vm69, %v1599, 0.0
    %1690 = vadd.xlane.f32.xlu0 %v1689
    %v1691 = vpop.xlane.xlu0 %1690
    %v1692 = vsel %vm69, %v1601, 0.0
    %1693 = vadd.xlane.f32.xlu0 %v1692
    %v1694 = vpop.xlane.xlu0 %1693
    %v1695 = vsel %vm69, %v1603, 0.0
    %1696 = vadd.xlane.f32.xlu0 %v1695
    %v1697 = vpop.xlane.xlu0 %1696
    %v1698 = vsel %vm69, %v1605, 0.0
    %1699 = vadd.xlane.f32.xlu0 %v1698
    %v1700 = vpop.xlane.xlu0 %1699
    %v1701 = vsel %vm69, %v1607, 0.0
    %1702 = vadd.xlane.f32.xlu0 %v1701
    %v1703 = vpop.xlane.xlu0 %1702
    %v1704 = vrcp.pop %v1610
    %v1705 = vrcp.pop %v1613
    %v1706 = vrcp.pop %v1616
    %v1707 = vrcp.pop %v1619
    %v1708 = vrcp.pop %v1622
    %v1709 = vrcp.pop %v1625
    %v1710 = vrcp.pop %v1628
    %v1711 = vrcp.pop %v1631
    %v1712 = vrcp.pop %v1634
    %v1713 = vrcp.pop %v1637
    %v1714 = vrcp.pop %v1640
    %v1715 = vrcp.pop %v1643
    %v1716 = vrcp.pop %v1646
    %v1717 = vrcp.pop %v1649
    %v1718 = vrcp.pop %v1652
    %v1719 = vrcp.pop %v1655
    %v1720 = vrcp.pop %v1658
    %v1721 = vrcp.pop %v1661
    %v1722 = vrcp.pop %v1664
    %v1723 = vrcp.pop %v1667
    %v1724 = vrcp.pop %v1670
    %v1725 = vrcp.pop %v1673
    %v1726 = vrcp.pop %v1676
    %v1727 = vrcp.pop %v1679
    %v1728 = vrcp.pop %v1682
    %v1729 = vrcp.pop %v1685
    %v1730 = vrcp.pop %v1688
    %v1731 = vrcp.pop %v1691
    %v1732 = vrcp.pop %v1694
    %v1733 = vrcp.pop %v1697
    %v1734 = vrcp.pop %v1700
    %v1735 = vrcp.pop %v1703
    %v1736 = vmul.f32 %v1545, %v1704
    %v1737 = vmul.f32 %v1547, %v1705
    %v1738 = vmul.f32 %v1549, %v1706
    %v1739 = vmul.f32 %v1551, %v1707
    %v1740 = vmul.f32 %v1553, %v1708
    %v1741 = vmul.f32 %v1555, %v1709
    %v1742 = vmul.f32 %v1557, %v1710
    %v1743 = vmul.f32 %v1559, %v1711
    %v1744 = vmul.f32 %v1561, %v1712
    %v1745 = vmul.f32 %v1563, %v1713
    %v1746 = vmul.f32 %v1565, %v1714
    %v1747 = vmul.f32 %v1567, %v1715
    %v1748 = vmul.f32 %v1569, %v1716
    %v1749 = vmul.f32 %v1571, %v1717
    %v1750 = vmul.f32 %v1573, %v1718
    %v1751 = vmul.f32 %v1575, %v1719
    %v1752 = vmul.f32 %v1577, %v1720
    %v1753 = vmul.f32 %v1579, %v1721
    %v1754 = vmul.f32 %v1581, %v1722
    %v1755 = vmul.f32 %v1583, %v1723
    %v1756 = vmul.f32 %v1585, %v1724
    %v1757 = vmul.f32 %v1587, %v1725
    %v1758 = vmul.f32 %v1589, %v1726
    %v1759 = vmul.f32 %v1591, %v1727
    %v1760 = vmul.f32 %v1593, %v1728
    %v1761 = vmul.f32 %v1595, %v1729
    %v1762 = vmul.f32 %v1597, %v1730
    %v1763 = vmul.f32 %v1599, %v1731
    %v1764 = vmul.f32 %v1601, %v1732
    %v1765 = vmul.f32 %v1603, %v1733
    %v1766 = vmul.f32 %v1605, %v1734
    %v1767 = vmul.f32 %v1607, %v1735
    %v1768 = vpack.c.bf16 %v1736, %v1736
    %v1769 = vpack.c.bf16 %v1737, %v1737
    %v1770 = vpack.c.bf16 %v1738, %v1738
    %v1771 = vpack.c.bf16 %v1739, %v1739
    %v1772 = vpack.c.bf16 %v1740, %v1740
    %v1773 = vpack.c.bf16 %v1741, %v1741
    %v1774 = vpack.c.bf16 %v1742, %v1742
    %v1775 = vpack.c.bf16 %v1743, %v1743
    %v1776 = vpack.c.bf16 %v1744, %v1744
    %v1777 = vpack.c.bf16 %v1745, %v1745
    %v1778 = vpack.c.bf16 %v1746, %v1746
    %v1779 = vpack.c.bf16 %v1747, %v1747
    %v1780 = vpack.c.bf16 %v1748, %v1748
    %v1781 = vpack.c.bf16 %v1749, %v1749
    %v1782 = vpack.c.bf16 %v1750, %v1750
    %v1783 = vpack.c.bf16 %v1751, %v1751
    %v1784 = vpack.c.bf16 %v1752, %v1752
    %v1785 = vpack.c.bf16 %v1753, %v1753
    %v1786 = vpack.c.bf16 %v1754, %v1754
    %v1787 = vpack.c.bf16 %v1755, %v1755
    %v1788 = vpack.c.bf16 %v1756, %v1756
    %v1789 = vpack.c.bf16 %v1757, %v1757
    %v1790 = vpack.c.bf16 %v1758, %v1758
    %v1791 = vpack.c.bf16 %v1759, %v1759
    %v1792 = vpack.c.bf16 %v1760, %v1760
    %v1793 = vpack.c.bf16 %v1761, %v1761
    %v1794 = vpack.c.bf16 %v1762, %v1762
    %v1795 = vpack.c.bf16 %v1763, %v1763
    %v1796 = vpack.c.bf16 %v1764, %v1764
    %v1797 = vpack.c.bf16 %v1765, %v1765
    %v1798 = vpack.c.bf16 %v1766, %v1766
    %v1799 = vpack.c.bf16 %v1767, %v1767
    %v1800 = vpack.c.bf16 %v285, %v285
    %v1801 = vpack.c.bf16 %v286, %v286
    %v1802 = vpack.c.bf16 %v283, %v283
    %v1803 = vpack.c.bf16 %v284, %v284
    %v1804 = vpack.c.bf16 %v500, %v500
    %v1805 = vpack.c.bf16 %v502, %v502
    %v1806 = vpack.c.bf16 %v504, %v504
    %v1807 = vpack.c.bf16 %v506, %v506
    %v1808 = vpack.c.bf16 %v512, %v512
    %v1809 = vpack.c.bf16 %v514, %v514
    %v1810 = vpack.c.bf16 %v516, %v516
    %v1811 = vpack.c.bf16 %v518, %v518
    %v1812 = vpack.c.bf16 %v524, %v524
    %v1813 = vpack.c.bf16 %v526, %v526
    %v1814 = vpack.c.bf16 %v528, %v528
    %v1815 = vpack.c.bf16 %v530, %v530
    %v1816 = vpack.c.bf16 %v536, %v536
    %v1817 = vpack.c.bf16 %v538, %v538
    %v1818 = vpack.c.bf16 %v540, %v540
    %v1819 = vpack.c.bf16 %v542, %v542
    %v1820 = vpack.c.bf16 %v548, %v548
    %v1821 = vpack.c.bf16 %v550, %v550
    %v1822 = vpack.c.bf16 %v552, %v552
    %v1823 = vpack.c.bf16 %v554, %v554
    %v1824 = vpack.c.bf16 %v560, %v560
    %v1825 = vpack.c.bf16 %v562, %v562
    %v1826 = vpack.c.bf16 %v564, %v564
    %v1827 = vpack.c.bf16 %v566, %v566
    %v1828 = vpack.c.bf16 %v572, %v572
    %v1829 = vpack.c.bf16 %v574, %v574
    %v1830 = vpack.c.bf16 %v576, %v576
    %v1831 = vpack.c.bf16 %v578, %v578
    %v1833 = vunpack.c.l.b16 %v1800
    %v1834 = vpack.c.b16 %v1833, %v1833
    %1835 = vrot.lane.b32.xlu0 %v1834, 64
    %v1836 = vpop.permute.xlu0 %1835
    %v1838 = vsel %vm69, %v1768, 0
    %v1841 = vsel %vm73, %v1836, 0
    %1843 = vmatpush.bf16.msra.mxu0 0
    %1844 = vmatpush.bf16.msra.mxu0 0
    %1845 = vmatpush.bf16.msra.mxu0 0
    %1846 = vmatpush.bf16.msra.mxu0 0
    %1847 = vmatpush.bf16.msra.mxu0 0
    %1848 = vmatpush.bf16.msra.mxu0 0
    %1849 = vmatpush.bf16.msra.mxu0 0
    %1850 = vmatpush.bf16.msra.mxu0 %v1841
    %1851 = vmatmul.bf16.gmra.mxu0 %v1838
    %v1852 = vpop.f32.mrf.mxu0
    %v1853 = vadd.f32 0.0, %v1852
    %v1854 = vpop.f32.mrf.mxu0
    %1855 = vdwg.mxu0
    %v1857 = vunpack.c.l.b16 %v1801
    %v1858 = vpack.c.b16 %v1857, %v1857
    %1859 = vrot.lane.b32.xlu0 %v1858, 64
    %v1860 = vpop.permute.xlu0 %1859
    %v1862 = vsel %vm69, %v1769, 0
    %v1865 = vsel %vm73, %v1860, 0
    %1867 = vmatpush.bf16.msra.mxu0 0
    %1868 = vmatpush.bf16.msra.mxu0 0
    %1869 = vmatpush.bf16.msra.mxu0 0
    %1870 = vmatpush.bf16.msra.mxu0 0
    %1871 = vmatpush.bf16.msra.mxu0 0
    %1872 = vmatpush.bf16.msra.mxu0 0
    %1873 = vmatpush.bf16.msra.mxu0 0
    %1874 = vmatpush.bf16.msra.mxu0 %v1865
    %1875 = vmatmul.bf16.gmra.mxu0 %v1862
    %v1876 = vpop.f32.mrf.mxu0
    %v1877 = vadd.f32 0.0, %v1876
    %v1878 = vpop.f32.mrf.mxu0
    %1879 = vdwg.mxu0
    %v1881 = vunpack.c.l.b16 %v1802
    %v1882 = vpack.c.b16 %v1881, %v1881
    %1883 = vrot.lane.b32.xlu0 %v1882, 64
    %v1884 = vpop.permute.xlu0 %1883
    %v1886 = vsel %vm69, %v1770, 0
    %v1889 = vsel %vm73, %v1884, 0
    %1891 = vmatpush.bf16.msra.mxu0 0
    %1892 = vmatpush.bf16.msra.mxu0 0
    %1893 = vmatpush.bf16.msra.mxu0 0
    %1894 = vmatpush.bf16.msra.mxu0 0
    %1895 = vmatpush.bf16.msra.mxu0 0
    %1896 = vmatpush.bf16.msra.mxu0 0
    %1897 = vmatpush.bf16.msra.mxu0 0
    %1898 = vmatpush.bf16.msra.mxu0 %v1889
    %1899 = vmatmul.bf16.gmra.mxu0 %v1886
    %v1900 = vpop.f32.mrf.mxu0
    %v1901 = vadd.f32 0.0, %v1900
    %v1902 = vpop.f32.mrf.mxu0
    %1903 = vdwg.mxu0
    %v1905 = vunpack.c.l.b16 %v1803
    %v1906 = vpack.c.b16 %v1905, %v1905
    %1907 = vrot.lane.b32.xlu0 %v1906, 64
    %v1908 = vpop.permute.xlu0 %1907
    %v1910 = vsel %vm69, %v1771, 0
    %v1913 = vsel %vm73, %v1908, 0
    %1915 = vmatpush.bf16.msra.mxu0 0
    %1916 = vmatpush.bf16.msra.mxu0 0
    %1917 = vmatpush.bf16.msra.mxu0 0
    %1918 = vmatpush.bf16.msra.mxu0 0
    %1919 = vmatpush.bf16.msra.mxu0 0
    %1920 = vmatpush.bf16.msra.mxu0 0
    %1921 = vmatpush.bf16.msra.mxu0 0
    %1922 = vmatpush.bf16.msra.mxu0 %v1913
    %1923 = vmatmul.bf16.gmra.mxu0 %v1910
    %v1924 = vpop.f32.mrf.mxu0
    %v1925 = vadd.f32 0.0, %v1924
    %v1926 = vpop.f32.mrf.mxu0
    %1927 = vdwg.mxu0
    %v1929 = vunpack.c.l.b16 %v1804
    %v1930 = vpack.c.b16 %v1929, %v1929
    %1931 = vrot.lane.b32.xlu0 %v1930, 64
    %v1932 = vpop.permute.xlu0 %1931
    %v1934 = vsel %vm69, %v1772, 0
    %v1937 = vsel %vm73, %v1932, 0
    %1939 = vmatpush.bf16.msra.mxu0 0
    %1940 = vmatpush.bf16.msra.mxu0 0
    %1941 = vmatpush.bf16.msra.mxu0 0
    %1942 = vmatpush.bf16.msra.mxu0 0
    %1943 = vmatpush.bf16.msra.mxu0 0
    %1944 = vmatpush.bf16.msra.mxu0 0
    %1945 = vmatpush.bf16.msra.mxu0 0
    %1946 = vmatpush.bf16.msra.mxu0 %v1937
    %1947 = vmatmul.bf16.gmra.mxu0 %v1934
    %v1948 = vpop.f32.mrf.mxu0
    %v1949 = vadd.f32 0.0, %v1948
    %v1950 = vpop.f32.mrf.mxu0
    %1951 = vdwg.mxu0
    %v1953 = vunpack.c.l.b16 %v1805
    %v1954 = vpack.c.b16 %v1953, %v1953
    %1955 = vrot.lane.b32.xlu0 %v1954, 64
    %v1956 = vpop.permute.xlu0 %1955
    %v1958 = vsel %vm69, %v1773, 0
    %v1961 = vsel %vm73, %v1956, 0
    %1963 = vmatpush.bf16.msra.mxu0 0
    %1964 = vmatpush.bf16.msra.mxu0 0
    %1965 = vmatpush.bf16.msra.mxu0 0
    %1966 = vmatpush.bf16.msra.mxu0 0
    %1967 = vmatpush.bf16.msra.mxu0 0
    %1968 = vmatpush.bf16.msra.mxu0 0
    %1969 = vmatpush.bf16.msra.mxu0 0
    %1970 = vmatpush.bf16.msra.mxu0 %v1961
    %1971 = vmatmul.bf16.gmra.mxu0 %v1958
    %v1972 = vpop.f32.mrf.mxu0
    %v1973 = vadd.f32 0.0, %v1972
    %v1974 = vpop.f32.mrf.mxu0
    %1975 = vdwg.mxu0
    %v1977 = vunpack.c.l.b16 %v1806
    %v1978 = vpack.c.b16 %v1977, %v1977
    %1979 = vrot.lane.b32.xlu0 %v1978, 64
    %v1980 = vpop.permute.xlu0 %1979
    %v1982 = vsel %vm69, %v1774, 0
    %v1985 = vsel %vm73, %v1980, 0
    %1987 = vmatpush.bf16.msra.mxu0 0
    %1988 = vmatpush.bf16.msra.mxu0 0
    %1989 = vmatpush.bf16.msra.mxu0 0
    %1990 = vmatpush.bf16.msra.mxu0 0
    %1991 = vmatpush.bf16.msra.mxu0 0
    %1992 = vmatpush.bf16.msra.mxu0 0
    %1993 = vmatpush.bf16.msra.mxu0 0
    %1994 = vmatpush.bf16.msra.mxu0 %v1985
    %1995 = vmatmul.bf16.gmra.mxu0 %v1982
    %v1996 = vpop.f32.mrf.mxu0
    %v1997 = vadd.f32 0.0, %v1996
    %v1998 = vpop.f32.mrf.mxu0
    %1999 = vdwg.mxu0
    %v2001 = vunpack.c.l.b16 %v1807
    %v2002 = vpack.c.b16 %v2001, %v2001
    %2003 = vrot.lane.b32.xlu0 %v2002, 64
    %v2004 = vpop.permute.xlu0 %2003
    %v2006 = vsel %vm69, %v1775, 0
    %v2009 = vsel %vm73, %v2004, 0
    %2011 = vmatpush.bf16.msra.mxu0 0
    %2012 = vmatpush.bf16.msra.mxu0 0
    %2013 = vmatpush.bf16.msra.mxu0 0
    %2014 = vmatpush.bf16.msra.mxu0 0
    %2015 = vmatpush.bf16.msra.mxu0 0
    %2016 = vmatpush.bf16.msra.mxu0 0
    %2017 = vmatpush.bf16.msra.mxu0 0
    %2018 = vmatpush.bf16.msra.mxu0 %v2009
    %2019 = vmatmul.bf16.gmra.mxu0 %v2006
    %v2020 = vpop.f32.mrf.mxu0
    %v2021 = vadd.f32 0.0, %v2020
    %v2022 = vpop.f32.mrf.mxu0
    %2023 = vdwg.mxu0
    %v2025 = vunpack.c.l.b16 %v1808
    %v2026 = vpack.c.b16 %v2025, %v2025
    %2027 = vrot.lane.b32.xlu0 %v2026, 64
    %v2028 = vpop.permute.xlu0 %2027
    %v2030 = vsel %vm69, %v1776, 0
    %v2033 = vsel %vm73, %v2028, 0
    %2035 = vmatpush.bf16.msra.mxu0 0
    %2036 = vmatpush.bf16.msra.mxu0 0
    %2037 = vmatpush.bf16.msra.mxu0 0
    %2038 = vmatpush.bf16.msra.mxu0 0
    %2039 = vmatpush.bf16.msra.mxu0 0
    %2040 = vmatpush.bf16.msra.mxu0 0
    %2041 = vmatpush.bf16.msra.mxu0 0
    %2042 = vmatpush.bf16.msra.mxu0 %v2033
    %2043 = vmatmul.bf16.gmra.mxu0 %v2030
    %v2044 = vpop.f32.mrf.mxu0
    %v2045 = vadd.f32 0.0, %v2044
    %v2046 = vpop.f32.mrf.mxu0
    %2047 = vdwg.mxu0
    %v2049 = vunpack.c.l.b16 %v1809
    %v2050 = vpack.c.b16 %v2049, %v2049
    %2051 = vrot.lane.b32.xlu0 %v2050, 64
    %v2052 = vpop.permute.xlu0 %2051
    %v2054 = vsel %vm69, %v1777, 0
    %v2057 = vsel %vm73, %v2052, 0
    %2059 = vmatpush.bf16.msra.mxu0 0
    %2060 = vmatpush.bf16.msra.mxu0 0
    %2061 = vmatpush.bf16.msra.mxu0 0
    %2062 = vmatpush.bf16.msra.mxu0 0
    %2063 = vmatpush.bf16.msra.mxu0 0
    %2064 = vmatpush.bf16.msra.mxu0 0
    %2065 = vmatpush.bf16.msra.mxu0 0
    %2066 = vmatpush.bf16.msra.mxu0 %v2057
    %2067 = vmatmul.bf16.gmra.mxu0 %v2054
    %v2068 = vpop.f32.mrf.mxu0
    %v2069 = vadd.f32 0.0, %v2068
    %v2070 = vpop.f32.mrf.mxu0
    %2071 = vdwg.mxu0
    %v2073 = vunpack.c.l.b16 %v1810
    %v2074 = vpack.c.b16 %v2073, %v2073
    %2075 = vrot.lane.b32.xlu0 %v2074, 64
    %v2076 = vpop.permute.xlu0 %2075
    %v2078 = vsel %vm69, %v1778, 0
    %v2081 = vsel %vm73, %v2076, 0
    %2083 = vmatpush.bf16.msra.mxu0 0
    %2084 = vmatpush.bf16.msra.mxu0 0
    %2085 = vmatpush.bf16.msra.mxu0 0
    %2086 = vmatpush.bf16.msra.mxu0 0
    %2087 = vmatpush.bf16.msra.mxu0 0
    %2088 = vmatpush.bf16.msra.mxu0 0
    %2089 = vmatpush.bf16.msra.mxu0 0
    %2090 = vmatpush.bf16.msra.mxu0 %v2081
    %2091 = vmatmul.bf16.gmra.mxu0 %v2078
    %v2092 = vpop.f32.mrf.mxu0
    %v2093 = vadd.f32 0.0, %v2092
    %v2094 = vpop.f32.mrf.mxu0
    %2095 = vdwg.mxu0
    %v2097 = vunpack.c.l.b16 %v1811
    %v2098 = vpack.c.b16 %v2097, %v2097
    %2099 = vrot.lane.b32.xlu0 %v2098, 64
    %v2100 = vpop.permute.xlu0 %2099
    %v2102 = vsel %vm69, %v1779, 0
    %v2105 = vsel %vm73, %v2100, 0
    %2107 = vmatpush.bf16.msra.mxu0 0
    %2108 = vmatpush.bf16.msra.mxu0 0
    %2109 = vmatpush.bf16.msra.mxu0 0
    %2110 = vmatpush.bf16.msra.mxu0 0
    %2111 = vmatpush.bf16.msra.mxu0 0
    %2112 = vmatpush.bf16.msra.mxu0 0
    %2113 = vmatpush.bf16.msra.mxu0 0
    %2114 = vmatpush.bf16.msra.mxu0 %v2105
    %2115 = vmatmul.bf16.gmra.mxu0 %v2102
    %v2116 = vpop.f32.mrf.mxu0
    %v2117 = vadd.f32 0.0, %v2116
    %v2118 = vpop.f32.mrf.mxu0
    %2119 = vdwg.mxu0
    %v2121 = vunpack.c.l.b16 %v1812
    %v2122 = vpack.c.b16 %v2121, %v2121
    %2123 = vrot.lane.b32.xlu0 %v2122, 64
    %v2124 = vpop.permute.xlu0 %2123
    %v2126 = vsel %vm69, %v1780, 0
    %v2129 = vsel %vm73, %v2124, 0
    %2131 = vmatpush.bf16.msra.mxu0 0
    %2132 = vmatpush.bf16.msra.mxu0 0
    %2133 = vmatpush.bf16.msra.mxu0 0
    %2134 = vmatpush.bf16.msra.mxu0 0
    %2135 = vmatpush.bf16.msra.mxu0 0
    %2136 = vmatpush.bf16.msra.mxu0 0
    %2137 = vmatpush.bf16.msra.mxu0 0
    %2138 = vmatpush.bf16.msra.mxu0 %v2129
    %2139 = vmatmul.bf16.gmra.mxu0 %v2126
    %v2140 = vpop.f32.mrf.mxu0
    %v2141 = vadd.f32 0.0, %v2140
    %v2142 = vpop.f32.mrf.mxu0
    %2143 = vdwg.mxu0
    %v2145 = vunpack.c.l.b16 %v1813
    %v2146 = vpack.c.b16 %v2145, %v2145
    %2147 = vrot.lane.b32.xlu0 %v2146, 64
    %v2148 = vpop.permute.xlu0 %2147
    %v2150 = vsel %vm69, %v1781, 0
    %v2153 = vsel %vm73, %v2148, 0
    %2155 = vmatpush.bf16.msra.mxu0 0
    %2156 = vmatpush.bf16.msra.mxu0 0
    %2157 = vmatpush.bf16.msra.mxu0 0
    %2158 = vmatpush.bf16.msra.mxu0 0
    %2159 = vmatpush.bf16.msra.mxu0 0
    %2160 = vmatpush.bf16.msra.mxu0 0
    %2161 = vmatpush.bf16.msra.mxu0 0
    %2162 = vmatpush.bf16.msra.mxu0 %v2153
    %2163 = vmatmul.bf16.gmra.mxu0 %v2150
    %v2164 = vpop.f32.mrf.mxu0
    %v2165 = vadd.f32 0.0, %v2164
    %v2166 = vpop.f32.mrf.mxu0
    %2167 = vdwg.mxu0
    %v2169 = vunpack.c.l.b16 %v1814
    %v2170 = vpack.c.b16 %v2169, %v2169
    %2171 = vrot.lane.b32.xlu0 %v2170, 64
    %v2172 = vpop.permute.xlu0 %2171
    %v2174 = vsel %vm69, %v1782, 0
    %v2177 = vsel %vm73, %v2172, 0
    %2179 = vmatpush.bf16.msra.mxu0 0
    %2180 = vmatpush.bf16.msra.mxu0 0
    %2181 = vmatpush.bf16.msra.mxu0 0
    %2182 = vmatpush.bf16.msra.mxu0 0
    %2183 = vmatpush.bf16.msra.mxu0 0
    %2184 = vmatpush.bf16.msra.mxu0 0
    %2185 = vmatpush.bf16.msra.mxu0 0
    %2186 = vmatpush.bf16.msra.mxu0 %v2177
    %2187 = vmatmul.bf16.gmra.mxu0 %v2174
    %v2188 = vpop.f32.mrf.mxu0
    %v2189 = vadd.f32 0.0, %v2188
    %v2190 = vpop.f32.mrf.mxu0
    %2191 = vdwg.mxu0
    %v2193 = vunpack.c.l.b16 %v1815
    %v2194 = vpack.c.b16 %v2193, %v2193
    %2195 = vrot.lane.b32.xlu0 %v2194, 64
    %v2196 = vpop.permute.xlu0 %2195
    %v2198 = vsel %vm69, %v1783, 0
    %v2201 = vsel %vm73, %v2196, 0
    %2203 = vmatpush.bf16.msra.mxu0 0
    %2204 = vmatpush.bf16.msra.mxu0 0
    %2205 = vmatpush.bf16.msra.mxu0 0
    %2206 = vmatpush.bf16.msra.mxu0 0
    %2207 = vmatpush.bf16.msra.mxu0 0
    %2208 = vmatpush.bf16.msra.mxu0 0
    %2209 = vmatpush.bf16.msra.mxu0 0
    %2210 = vmatpush.bf16.msra.mxu0 %v2201
    %2211 = vmatmul.bf16.gmra.mxu0 %v2198
    %v2212 = vpop.f32.mrf.mxu0
    %v2213 = vadd.f32 0.0, %v2212
    %v2214 = vpop.f32.mrf.mxu0
    %2215 = vdwg.mxu0
    %v2217 = vunpack.c.l.b16 %v1816
    %v2218 = vpack.c.b16 %v2217, %v2217
    %2219 = vrot.lane.b32.xlu0 %v2218, 64
    %v2220 = vpop.permute.xlu0 %2219
    %v2222 = vsel %vm69, %v1784, 0
    %v2225 = vsel %vm73, %v2220, 0
    %2227 = vmatpush.bf16.msra.mxu0 0
    %2228 = vmatpush.bf16.msra.mxu0 0
    %2229 = vmatpush.bf16.msra.mxu0 0
    %2230 = vmatpush.bf16.msra.mxu0 0
    %2231 = vmatpush.bf16.msra.mxu0 0
    %2232 = vmatpush.bf16.msra.mxu0 0
    %2233 = vmatpush.bf16.msra.mxu0 0
    %2234 = vmatpush.bf16.msra.mxu0 %v2225
    %2235 = vmatmul.bf16.gmra.mxu0 %v2222
    %v2236 = vpop.f32.mrf.mxu0
    %v2237 = vadd.f32 0.0, %v2236
    %v2238 = vpop.f32.mrf.mxu0
    %2239 = vdwg.mxu0
    %v2241 = vunpack.c.l.b16 %v1817
    %v2242 = vpack.c.b16 %v2241, %v2241
    %2243 = vrot.lane.b32.xlu0 %v2242, 64
    %v2244 = vpop.permute.xlu0 %2243
    %v2246 = vsel %vm69, %v1785, 0
    %v2249 = vsel %vm73, %v2244, 0
    %2251 = vmatpush.bf16.msra.mxu0 0
    %2252 = vmatpush.bf16.msra.mxu0 0
    %2253 = vmatpush.bf16.msra.mxu0 0
    %2254 = vmatpush.bf16.msra.mxu0 0
    %2255 = vmatpush.bf16.msra.mxu0 0
    %2256 = vmatpush.bf16.msra.mxu0 0
    %2257 = vmatpush.bf16.msra.mxu0 0
    %2258 = vmatpush.bf16.msra.mxu0 %v2249
    %2259 = vmatmul.bf16.gmra.mxu0 %v2246
    %v2260 = vpop.f32.mrf.mxu0
    %v2261 = vadd.f32 0.0, %v2260
    %v2262 = vpop.f32.mrf.mxu0
    %2263 = vdwg.mxu0
    %v2265 = vunpack.c.l.b16 %v1818
    %v2266 = vpack.c.b16 %v2265, %v2265
    %2267 = vrot.lane.b32.xlu0 %v2266, 64
    %v2268 = vpop.permute.xlu0 %2267
    %v2270 = vsel %vm69, %v1786, 0
    %v2273 = vsel %vm73, %v2268, 0
    %2275 = vmatpush.bf16.msra.mxu0 0
    %2276 = vmatpush.bf16.msra.mxu0 0
    %2277 = vmatpush.bf16.msra.mxu0 0
    %2278 = vmatpush.bf16.msra.mxu0 0
    %2279 = vmatpush.bf16.msra.mxu0 0
    %2280 = vmatpush.bf16.msra.mxu0 0
    %2281 = vmatpush.bf16.msra.mxu0 0
    %2282 = vmatpush.bf16.msra.mxu0 %v2273
    %2283 = vmatmul.bf16.gmra.mxu0 %v2270
    %v2284 = vpop.f32.mrf.mxu0
    %v2285 = vadd.f32 0.0, %v2284
    %v2286 = vpop.f32.mrf.mxu0
    %2287 = vdwg.mxu0
    %v2289 = vunpack.c.l.b16 %v1819
    %v2290 = vpack.c.b16 %v2289, %v2289
    %2291 = vrot.lane.b32.xlu0 %v2290, 64
    %v2292 = vpop.permute.xlu0 %2291
    %v2294 = vsel %vm69, %v1787, 0
    %v2297 = vsel %vm73, %v2292, 0
    %2299 = vmatpush.bf16.msra.mxu0 0
    %2300 = vmatpush.bf16.msra.mxu0 0
    %2301 = vmatpush.bf16.msra.mxu0 0
    %2302 = vmatpush.bf16.msra.mxu0 0
    %2303 = vmatpush.bf16.msra.mxu0 0
    %2304 = vmatpush.bf16.msra.mxu0 0
    %2305 = vmatpush.bf16.msra.mxu0 0
    %2306 = vmatpush.bf16.msra.mxu0 %v2297
    %2307 = vmatmul.bf16.gmra.mxu0 %v2294
    %v2308 = vpop.f32.mrf.mxu0
    %v2309 = vadd.f32 0.0, %v2308
    %v2310 = vpop.f32.mrf.mxu0
    %2311 = vdwg.mxu0
    %v2313 = vunpack.c.l.b16 %v1820
    %v2314 = vpack.c.b16 %v2313, %v2313
    %2315 = vrot.lane.b32.xlu0 %v2314, 64
    %v2316 = vpop.permute.xlu0 %2315
    %v2318 = vsel %vm69, %v1788, 0
    %v2321 = vsel %vm73, %v2316, 0
    %2323 = vmatpush.bf16.msra.mxu0 0
    %2324 = vmatpush.bf16.msra.mxu0 0
    %2325 = vmatpush.bf16.msra.mxu0 0
    %2326 = vmatpush.bf16.msra.mxu0 0
    %2327 = vmatpush.bf16.msra.mxu0 0
    %2328 = vmatpush.bf16.msra.mxu0 0
    %2329 = vmatpush.bf16.msra.mxu0 0
    %2330 = vmatpush.bf16.msra.mxu0 %v2321
    %2331 = vmatmul.bf16.gmra.mxu0 %v2318
    %v2332 = vpop.f32.mrf.mxu0
    %v2333 = vadd.f32 0.0, %v2332
    %v2334 = vpop.f32.mrf.mxu0
    %2335 = vdwg.mxu0
    %v2337 = vunpack.c.l.b16 %v1821
    %v2338 = vpack.c.b16 %v2337, %v2337
    %2339 = vrot.lane.b32.xlu0 %v2338, 64
    %v2340 = vpop.permute.xlu0 %2339
    %v2342 = vsel %vm69, %v1789, 0
    %v2345 = vsel %vm73, %v2340, 0
    %2347 = vmatpush.bf16.msra.mxu0 0
    %2348 = vmatpush.bf16.msra.mxu0 0
    %2349 = vmatpush.bf16.msra.mxu0 0
    %2350 = vmatpush.bf16.msra.mxu0 0
    %2351 = vmatpush.bf16.msra.mxu0 0
    %2352 = vmatpush.bf16.msra.mxu0 0
    %2353 = vmatpush.bf16.msra.mxu0 0
    %2354 = vmatpush.bf16.msra.mxu0 %v2345
    %2355 = vmatmul.bf16.gmra.mxu0 %v2342
    %v2356 = vpop.f32.mrf.mxu0
    %v2357 = vadd.f32 0.0, %v2356
    %v2358 = vpop.f32.mrf.mxu0
    %2359 = vdwg.mxu0
    %v2361 = vunpack.c.l.b16 %v1822
    %v2362 = vpack.c.b16 %v2361, %v2361
    %2363 = vrot.lane.b32.xlu0 %v2362, 64
    %v2364 = vpop.permute.xlu0 %2363
    %v2366 = vsel %vm69, %v1790, 0
    %v2369 = vsel %vm73, %v2364, 0
    %2371 = vmatpush.bf16.msra.mxu0 0
    %2372 = vmatpush.bf16.msra.mxu0 0
    %2373 = vmatpush.bf16.msra.mxu0 0
    %2374 = vmatpush.bf16.msra.mxu0 0
    %2375 = vmatpush.bf16.msra.mxu0 0
    %2376 = vmatpush.bf16.msra.mxu0 0
    %2377 = vmatpush.bf16.msra.mxu0 0
    %2378 = vmatpush.bf16.msra.mxu0 %v2369
    %2379 = vmatmul.bf16.gmra.mxu0 %v2366
    %v2380 = vpop.f32.mrf.mxu0
    %v2381 = vadd.f32 0.0, %v2380
    %v2382 = vpop.f32.mrf.mxu0
    %2383 = vdwg.mxu0
    %v2385 = vunpack.c.l.b16 %v1823
    %v2386 = vpack.c.b16 %v2385, %v2385
    %2387 = vrot.lane.b32.xlu0 %v2386, 64
    %v2388 = vpop.permute.xlu0 %2387
    %v2390 = vsel %vm69, %v1791, 0
    %v2393 = vsel %vm73, %v2388, 0
    %2395 = vmatpush.bf16.msra.mxu0 0
    %2396 = vmatpush.bf16.msra.mxu0 0
    %2397 = vmatpush.bf16.msra.mxu0 0
    %2398 = vmatpush.bf16.msra.mxu0 0
    %2399 = vmatpush.bf16.msra.mxu0 0
    %2400 = vmatpush.bf16.msra.mxu0 0
    %2401 = vmatpush.bf16.msra.mxu0 0
    %2402 = vmatpush.bf16.msra.mxu0 %v2393
    %2403 = vmatmul.bf16.gmra.mxu0 %v2390
    %v2404 = vpop.f32.mrf.mxu0
    %v2405 = vadd.f32 0.0, %v2404
    %v2406 = vpop.f32.mrf.mxu0
    %2407 = vdwg.mxu0
    %v2409 = vunpack.c.l.b16 %v1824
    %v2410 = vpack.c.b16 %v2409, %v2409
    %2411 = vrot.lane.b32.xlu0 %v2410, 64
    %v2412 = vpop.permute.xlu0 %2411
    %v2414 = vsel %vm69, %v1792, 0
    %v2417 = vsel %vm73, %v2412, 0
    %2419 = vmatpush.bf16.msra.mxu0 0
    %2420 = vmatpush.bf16.msra.mxu0 0
    %2421 = vmatpush.bf16.msra.mxu0 0
    %2422 = vmatpush.bf16.msra.mxu0 0
    %2423 = vmatpush.bf16.msra.mxu0 0
    %2424 = vmatpush.bf16.msra.mxu0 0
    %2425 = vmatpush.bf16.msra.mxu0 0
    %2426 = vmatpush.bf16.msra.mxu0 %v2417
    %2427 = vmatmul.bf16.gmra.mxu0 %v2414
    %v2428 = vpop.f32.mrf.mxu0
    %v2429 = vadd.f32 0.0, %v2428
    %v2430 = vpop.f32.mrf.mxu0
    %2431 = vdwg.mxu0
    %v2433 = vunpack.c.l.b16 %v1825
    %v2434 = vpack.c.b16 %v2433, %v2433
    %2435 = vrot.lane.b32.xlu0 %v2434, 64
    %v2436 = vpop.permute.xlu0 %2435
    %v2438 = vsel %vm69, %v1793, 0
    %v2441 = vsel %vm73, %v2436, 0
    %2443 = vmatpush.bf16.msra.mxu0 0
    %2444 = vmatpush.bf16.msra.mxu0 0
    %2445 = vmatpush.bf16.msra.mxu0 0
    %2446 = vmatpush.bf16.msra.mxu0 0
    %2447 = vmatpush.bf16.msra.mxu0 0
    %2448 = vmatpush.bf16.msra.mxu0 0
    %2449 = vmatpush.bf16.msra.mxu0 0
    %2450 = vmatpush.bf16.msra.mxu0 %v2441
    %2451 = vmatmul.bf16.gmra.mxu0 %v2438
    %v2452 = vpop.f32.mrf.mxu0
    %v2453 = vadd.f32 0.0, %v2452
    %v2454 = vpop.f32.mrf.mxu0
    %2455 = vdwg.mxu0
    %v2457 = vunpack.c.l.b16 %v1826
    %v2458 = vpack.c.b16 %v2457, %v2457
    %2459 = vrot.lane.b32.xlu0 %v2458, 64
    %v2460 = vpop.permute.xlu0 %2459
    %v2462 = vsel %vm69, %v1794, 0
    %v2465 = vsel %vm73, %v2460, 0
    %2467 = vmatpush.bf16.msra.mxu0 0
    %2468 = vmatpush.bf16.msra.mxu0 0
    %2469 = vmatpush.bf16.msra.mxu0 0
    %2470 = vmatpush.bf16.msra.mxu0 0
    %2471 = vmatpush.bf16.msra.mxu0 0
    %2472 = vmatpush.bf16.msra.mxu0 0
    %2473 = vmatpush.bf16.msra.mxu0 0
    %2474 = vmatpush.bf16.msra.mxu0 %v2465
    %2475 = vmatmul.bf16.gmra.mxu0 %v2462
    %v2476 = vpop.f32.mrf.mxu0
    %v2477 = vadd.f32 0.0, %v2476
    %v2478 = vpop.f32.mrf.mxu0
    %2479 = vdwg.mxu0
    %v2481 = vunpack.c.l.b16 %v1827
    %v2482 = vpack.c.b16 %v2481, %v2481
    %2483 = vrot.lane.b32.xlu0 %v2482, 64
    %v2484 = vpop.permute.xlu0 %2483
    %v2486 = vsel %vm69, %v1795, 0
    %v2489 = vsel %vm73, %v2484, 0
    %2491 = vmatpush.bf16.msra.mxu0 0
    %2492 = vmatpush.bf16.msra.mxu0 0
    %2493 = vmatpush.bf16.msra.mxu0 0
    %2494 = vmatpush.bf16.msra.mxu0 0
    %2495 = vmatpush.bf16.msra.mxu0 0
    %2496 = vmatpush.bf16.msra.mxu0 0
    %2497 = vmatpush.bf16.msra.mxu0 0
    %2498 = vmatpush.bf16.msra.mxu0 %v2489
    %2499 = vmatmul.bf16.gmra.mxu0 %v2486
    %v2500 = vpop.f32.mrf.mxu0
    %v2501 = vadd.f32 0.0, %v2500
    %v2502 = vpop.f32.mrf.mxu0
    %2503 = vdwg.mxu0
    %v2505 = vunpack.c.l.b16 %v1828
    %v2506 = vpack.c.b16 %v2505, %v2505
    %2507 = vrot.lane.b32.xlu0 %v2506, 64
    %v2508 = vpop.permute.xlu0 %2507
    %v2510 = vsel %vm69, %v1796, 0
    %v2513 = vsel %vm73, %v2508, 0
    %2515 = vmatpush.bf16.msra.mxu0 0
    %2516 = vmatpush.bf16.msra.mxu0 0
    %2517 = vmatpush.bf16.msra.mxu0 0
    %2518 = vmatpush.bf16.msra.mxu0 0
    %2519 = vmatpush.bf16.msra.mxu0 0
    %2520 = vmatpush.bf16.msra.mxu0 0
    %2521 = vmatpush.bf16.msra.mxu0 0
    %2522 = vmatpush.bf16.msra.mxu0 %v2513
    %2523 = vmatmul.bf16.gmra.mxu0 %v2510
    %v2524 = vpop.f32.mrf.mxu0
    %v2525 = vadd.f32 0.0, %v2524
    %v2526 = vpop.f32.mrf.mxu0
    %2527 = vdwg.mxu0
    %v2529 = vunpack.c.l.b16 %v1829
    %v2530 = vpack.c.b16 %v2529, %v2529
    %2531 = vrot.lane.b32.xlu0 %v2530, 64
    %v2532 = vpop.permute.xlu0 %2531
    %v2534 = vsel %vm69, %v1797, 0
    %v2537 = vsel %vm73, %v2532, 0
    %2539 = vmatpush.bf16.msra.mxu0 0
    %2540 = vmatpush.bf16.msra.mxu0 0
    %2541 = vmatpush.bf16.msra.mxu0 0
    %2542 = vmatpush.bf16.msra.mxu0 0
    %2543 = vmatpush.bf16.msra.mxu0 0
    %2544 = vmatpush.bf16.msra.mxu0 0
    %2545 = vmatpush.bf16.msra.mxu0 0
    %2546 = vmatpush.bf16.msra.mxu0 %v2537
    %2547 = vmatmul.bf16.gmra.mxu0 %v2534
    %v2548 = vpop.f32.mrf.mxu0
    %v2549 = vadd.f32 0.0, %v2548
    %v2550 = vpop.f32.mrf.mxu0
    %2551 = vdwg.mxu0
    %v2553 = vunpack.c.l.b16 %v1830
    %v2554 = vpack.c.b16 %v2553, %v2553
    %2555 = vrot.lane.b32.xlu0 %v2554, 64
    %v2556 = vpop.permute.xlu0 %2555
    %v2558 = vsel %vm69, %v1798, 0
    %v2561 = vsel %vm73, %v2556, 0
    %2563 = vmatpush.bf16.msra.mxu0 0
    %2564 = vmatpush.bf16.msra.mxu0 0
    %2565 = vmatpush.bf16.msra.mxu0 0
    %2566 = vmatpush.bf16.msra.mxu0 0
    %2567 = vmatpush.bf16.msra.mxu0 0
    %2568 = vmatpush.bf16.msra.mxu0 0
    %2569 = vmatpush.bf16.msra.mxu0 0
    %2570 = vmatpush.bf16.msra.mxu0 %v2561
    %2571 = vmatmul.bf16.gmra.mxu0 %v2558
    %v2572 = vpop.f32.mrf.mxu0
    %v2573 = vadd.f32 0.0, %v2572
    %v2574 = vpop.f32.mrf.mxu0
    %2575 = vdwg.mxu0
    %v2577 = vunpack.c.l.b16 %v1831
    %v2578 = vpack.c.b16 %v2577, %v2577
    %2579 = vrot.lane.b32.xlu0 %v2578, 64
    %v2580 = vpop.permute.xlu0 %2579
    %v2582 = vsel %vm69, %v1799, 0
    %v2585 = vsel %vm73, %v2580, 0
    %2587 = vmatpush.bf16.msra.mxu0 0
    %2588 = vmatpush.bf16.msra.mxu0 0
    %2589 = vmatpush.bf16.msra.mxu0 0
    %2590 = vmatpush.bf16.msra.mxu0 0
    %2591 = vmatpush.bf16.msra.mxu0 0
    %2592 = vmatpush.bf16.msra.mxu0 0
    %2593 = vmatpush.bf16.msra.mxu0 0
    %2594 = vmatpush.bf16.msra.mxu0 %v2585
    %2595 = vmatmul.bf16.gmra.mxu0 %v2582
    %v2596 = vpop.f32.mrf.mxu0
    %v2597 = vadd.f32 0.0, %v2596
    %v2598 = vpop.f32.mrf.mxu0
    %2599 = vdwg.mxu0
    %2604 = vrot.lane.b32.xlu0 %v1949, 4
    %v2605 = vpop.permute.xlu0 %2604
    %2606 = vrot.lane.b32.xlu0 %v1973, 4
    %v2607 = vpop.permute.xlu0 %2606
    %2608 = vrot.lane.b32.xlu0 %v1997, 4
    %v2609 = vpop.permute.xlu0 %2608
    %2610 = vrot.lane.b32.xlu0 %v2021, 4
    %v2611 = vpop.permute.xlu0 %2610
    %2620 = vrot.lane.b32.xlu0 %v2045, 8
    %v2621 = vpop.permute.xlu0 %2620
    %2622 = vrot.lane.b32.xlu0 %v2069, 8
    %v2623 = vpop.permute.xlu0 %2622
    %2624 = vrot.lane.b32.xlu0 %v2093, 8
    %v2625 = vpop.permute.xlu0 %2624
    %2626 = vrot.lane.b32.xlu0 %v2117, 8
    %v2627 = vpop.permute.xlu0 %2626
    %2636 = vrot.lane.b32.xlu0 %v2141, 12
    %v2637 = vpop.permute.xlu0 %2636
    %2638 = vrot.lane.b32.xlu0 %v2165, 12
    %v2639 = vpop.permute.xlu0 %2638
    %2640 = vrot.lane.b32.xlu0 %v2189, 12
    %v2641 = vpop.permute.xlu0 %2640
    %2642 = vrot.lane.b32.xlu0 %v2213, 12
    %v2643 = vpop.permute.xlu0 %2642
    %2652 = vrot.lane.b32.xlu0 %v2237, 16
    %v2653 = vpop.permute.xlu0 %2652
    %2654 = vrot.lane.b32.xlu0 %v2261, 16
    %v2655 = vpop.permute.xlu0 %2654
    %2656 = vrot.lane.b32.xlu0 %v2285, 16
    %v2657 = vpop.permute.xlu0 %2656
    %2658 = vrot.lane.b32.xlu0 %v2309, 16
    %v2659 = vpop.permute.xlu0 %2658
    %2668 = vrot.lane.b32.xlu0 %v2333, 20
    %v2669 = vpop.permute.xlu0 %2668
    %2670 = vrot.lane.b32.xlu0 %v2357, 20
    %v2671 = vpop.permute.xlu0 %2670
    %2672 = vrot.lane.b32.xlu0 %v2381, 20
    %v2673 = vpop.permute.xlu0 %2672
    %2674 = vrot.lane.b32.xlu0 %v2405, 20
    %v2675 = vpop.permute.xlu0 %2674
    %2684 = vrot.lane.b32.xlu0 %v2429, 24
    %v2685 = vpop.permute.xlu0 %2684
    %2686 = vrot.lane.b32.xlu0 %v2453, 24
    %v2687 = vpop.permute.xlu0 %2686
    %2688 = vrot.lane.b32.xlu0 %v2477, 24
    %v2689 = vpop.permute.xlu0 %2688
    %2690 = vrot.lane.b32.xlu0 %v2501, 24
    %v2691 = vpop.permute.xlu0 %2690
    %2700 = vrot.lane.b32.xlu0 %v2525, 28
    %v2701 = vpop.permute.xlu0 %2700
    %2702 = vrot.lane.b32.xlu0 %v2549, 28
    %v2703 = vpop.permute.xlu0 %2702
    %2704 = vrot.lane.b32.xlu0 %v2573, 28
    %v2705 = vpop.permute.xlu0 %2704
    %2706 = vrot.lane.b32.xlu0 %v2597, 28
    %v2707 = vpop.permute.xlu0 %2706
    %v2712 = vsel %vm652, %v1853, %v2605
    %v2713 = vsel %vm652, %v1877, %v2607
    %v2714 = vsel %vm652, %v1901, %v2609
    %v2715 = vsel %vm652, %v1925, %v2611
    %v2716 = vsel %vm69, %v2712, %v2621
    %v2717 = vsel %vm69, %v2713, %v2623
    %v2718 = vsel %vm69, %v2714, %v2625
    %v2719 = vsel %vm69, %v2715, %v2627
    %vm2720 = vcmask 97280
    %v2721 = vsel %vm2720, %v2716, %v2637
    %v2722 = vsel %vm2720, %v2717, %v2639
    %v2723 = vsel %vm2720, %v2718, %v2641
    %v2724 = vsel %vm2720, %v2719, %v2643
    %vm2725 = vcmask 130048
    %v2726 = vsel %vm2725, %v2721, %v2653
    %v2727 = vsel %vm2725, %v2722, %v2655
    %v2728 = vsel %vm2725, %v2723, %v2657
    %v2729 = vsel %vm2725, %v2724, %v2659
    %vm2730 = vcmask 162816
    %v2731 = vsel %vm2730, %v2726, %v2669
    %v2732 = vsel %vm2730, %v2727, %v2671
    %v2733 = vsel %vm2730, %v2728, %v2673
    %v2734 = vsel %vm2730, %v2729, %v2675
    %vm2735 = vcmask 195584
    %v2736 = vsel %vm2735, %v2731, %v2685
    %v2737 = vsel %vm2735, %v2732, %v2687
    %v2738 = vsel %vm2735, %v2733, %v2689
    %v2739 = vsel %vm2735, %v2734, %v2691
    %vm2740 = vcmask 228352
    %v2741 = vsel %vm2740, %v2736, %v2701
    %v2742 = vsel %vm2740, %v2737, %v2703
    %v2743 = vsel %vm2740, %v2738, %v2705
    %v2744 = vsel %vm2740, %v2739, %v2707
    %v2745 = vpack.c.bf16 %v2742, %v2741
    %v2746 = vpack.c.bf16 %v2744, %v2743
    %v2747 = vperm.slane %v58, 0
    %v2752 = vunpack.c.l.b16 %v39
    %v2753 = vunpack.c.l.b16 %v40
    %v2754 = vunpack.c.l.b16 %v41
    %v2755 = vunpack.c.l.b16 %v42
    %v2756 = vpack.c.b16 %v2753, %v2752
    %v2757 = vpack.c.b16 %v2755, %v2754
    %v2761 = vsel %vm103, %v2745, 0
    %v2764 = vsel %vm103, %v2746, 0
    %2766 = vmatpush.bf16.msra.mxu0 0
    %2767 = vmatpush.bf16.msra.mxu0 0
    %2768 = vmatpush.bf16.msra.mxu0 0
    %2769 = vmatpush.bf16.msra.mxu0 0
    %2770 = vmatpush.bf16.msra.mxu0 0
    %2771 = vmatpush.bf16.msra.mxu0 0
    %2772 = vmatpush.bf16.msra.mxu0 %v2757
    %2773 = vmatpush.bf16.msra.mxu0 %v2756
    %2774 = vmatmul.bf16.gmra.mxu0 %v2761
    %v2775 = vpop.f32.mrf.mxu0
    %v2776 = vadd.f32 %v2747, %v2775
    %v2777 = vpop.f32.mrf.mxu0
    %v2778 = vadd.f32 %v2747, %v2777
    %2779 = vmatmul.bf16.gmra.mxu0 %v2764
    %v2780 = vpop.f32.mrf.mxu0
    %v2781 = vadd.f32 %v2747, %v2780
    %v2782 = vpop.f32.mrf.mxu0
    %v2783 = vadd.f32 %v2747, %v2782
    %2784 = vdwg.mxu0
    %v2785 = vpack.c.bf16 %v2778, %v2776
    %v2786 = vpack.c.bf16 %v2783, %v2781
    %v2791 = vunpack.c.l.b16 %v47
    %v2792 = vunpack.c.l.b16 %v48
    %v2793 = vunpack.c.l.b16 %v49
    %v2794 = vunpack.c.l.b16 %v50
    %v2795 = vpack.c.b16 %v2792, %v2791
    %v2796 = vpack.c.b16 %v2794, %v2793
    %v2800 = vsel %vm103, %v2786, 0
    %2802 = vmatpush.bf16.msra.mxu0 0
    %2803 = vmatpush.bf16.msra.mxu0 0
    %2804 = vmatpush.bf16.msra.mxu0 0
    %2805 = vmatpush.bf16.msra.mxu0 0
    %2806 = vmatpush.bf16.msra.mxu0 0
    %2807 = vmatpush.bf16.msra.mxu0 0
    %2808 = vmatpush.bf16.msra.mxu0 %v2796
    %2809 = vmatpush.bf16.msra.mxu0 %v2795
    %2810 = vmatmul.bf16.gmra.mxu0 %v2800
    %v2811 = vpop.f32.mrf.mxu0
    %v2812 = vadd.f32 0.0, %v2811
    %v2813 = vpop.f32.mrf.mxu0
    %v2814 = vadd.f32 0.0, %v2813
    %2815 = vdwg.mxu0
    %v2820 = vunpack.c.l.b16 %v43
    %v2821 = vunpack.c.l.b16 %v44
    %v2822 = vunpack.c.l.b16 %v45
    %v2823 = vunpack.c.l.b16 %v46
    %v2824 = vpack.c.b16 %v2821, %v2820
    %v2825 = vpack.c.b16 %v2823, %v2822
    %v2829 = vsel %vm103, %v2785, 0
    %2831 = vmatpush.bf16.msra.mxu0 0
    %2832 = vmatpush.bf16.msra.mxu0 0
    %2833 = vmatpush.bf16.msra.mxu0 0
    %2834 = vmatpush.bf16.msra.mxu0 0
    %2835 = vmatpush.bf16.msra.mxu0 0
    %2836 = vmatpush.bf16.msra.mxu0 0
    %2837 = vmatpush.bf16.msra.mxu0 %v2825
    %2838 = vmatpush.bf16.msra.mxu0 %v2824
    %2839 = vmatmul.bf16.gmra.mxu0 %v2829
    %v2840 = vpop.f32.mrf.mxu0
    %v2841 = vadd.f32 %v2812, %v2840
    %v2842 = vpop.f32.mrf.mxu0
    %v2843 = vadd.f32 %v2814, %v2842
    %2844 = vdwg.mxu0
    %v2845 = vperm.slane %v59, 0
    %v2846 = vadd.f32 %v2841, %v2845
    %v2847 = vadd.f32 %v2843, %v2845
    %v2848 = vxor.u32 %v2846, 2147483648
    %v2849 = vxor.u32 %v2847, 2147483648
    %v2850 = vmul.f32 %v2848, 1.442695
    %v2851 = vpow.pop %v2850
    %v2852 = vmul.f32 %v2849, 1.442695
    %v2853 = vpow.pop %v2852
    %v2854 = vadd.f32 %v2851, 1.0
    %v2855 = vadd.f32 %v2853, 1.0
    %v2856 = vrcp.pop %v2854
    %v2857 = vmul.f32 %v2854, %v2856
    %v2858 = vsub.f32 1.0, %v2857
    %v2859 = vmul.f32 %v2856, %v2858
    %v2860 = vadd.f32 %v2856, %v2859
    %vm2861 = vweird.f32 %v2854
    %vm2862 = vweird.f32 %v2856
    %vm2863 = vmor %vm2861, %vm2862
    %v2864 = vsel %vm2863, %v2856, %v2860
    %v2865 = vand.u32 2147483647, %v2854
    %vm2866 = vcmp.eq.f32.partialorder %v2865, 8.507059e+37
    %v2867 = vand.u32 %v2854, 2147483648
    %v2868 = vor.u32 1.1754944e-38, %v2867
    %v2869 = vsel %vm2866, %v2868, %v2864
    %v2870 = vmul.f32 1.0, %v2869
    %v2871 = vrcp.pop %v2855
    %v2872 = vmul.f32 %v2855, %v2871
    %v2873 = vsub.f32 1.0, %v2872
    %v2874 = vmul.f32 %v2871, %v2873
    %v2875 = vadd.f32 %v2871, %v2874
    %vm2876 = vweird.f32 %v2855
    %vm2877 = vweird.f32 %v2871
    %vm2878 = vmor %vm2876, %vm2877
    %v2879 = vsel %vm2878, %v2871, %v2875
    %v2880 = vand.u32 2147483647, %v2855
    %vm2881 = vcmp.eq.f32.partialorder %v2880, 8.507059e+37
    %v2882 = vand.u32 %v2855, 2147483648
    %v2883 = vor.u32 1.1754944e-38, %v2882
    %v2884 = vsel %vm2881, %v2883, %v2879
    %v2885 = vmul.f32 1.0, %v2884
    %v2886 = vmul.f32 %v2870, %v2776
    %v2887 = vmul.f32 %v2885, %v2778
    %v2888 = vsub.f32 1.0, %v2870
    %v2889 = vsub.f32 1.0, %v2885
    %v2890 = vmul.f32 %v2888, %v2781
    %v2891 = vmul.f32 %v2889, %v2783
    %v2892 = vadd.f32 %v2886, %v2890
    %v2893 = vadd.f32 %v2887, %v2891
    %2894 = vst.msk [vmem:[#allocation2] sm:$0xff] %vm103, %v2892
    %2895 = vst.msk [vmem:[#allocation2 + $0x8] sm:$0xff] %vm103, %v2893
    // Predicated region
    $region22: #{tpu_custom_call.1} parent=1 // pred_check
      _
    $region23: #{tpu_custom_call.1} parent=1 // pred_check_branch
      %2897 = sbr.rel (0) target = $region25
    $region24: #{tpu_custom_call.1} parent=1 // pred_region
      %2899 = vsyncadd [#allocation3], 0
      %s2900 = sshll.u32 [#allocation2], 4
      %s2901 = int_to_ptr.vmem [resolvable:$true] %s2900
      %s2902 = sshll.u32 %s5, 4
      %s2903 = int_to_ptr.hbm [resolvable:$true] %s2902
      %2908 = dma.vmem_to_hbm [thread:$0]  %s2901, 256, %s2903, [#allocation3], 128, 128, 8
    $region25: #{tpu_custom_call.1} parent=1 // pred_fallthru
      _
    // Predicated region
    $region26: #{tpu_custom_call.1} parent=1 // pred_check
      _
    $region27: #{tpu_custom_call.1} parent=1 // pred_check_branch
      %2910 = sbr.rel (0) target = $region29
    $region28: #{tpu_custom_call.1} parent=1 // pred_region
      %2912 = dma.done [#allocation3], 256
    $region29: #{tpu_custom_call.1} parent=1 // pred_fallthru
      _
    %2913 = vsyncpa [#allocation3], 1

</llo_original>
